<compile_context>
chip_gen: v6e
topology: v6e:2x2x1
jax: 0.10.0
libtpu: 0.0.40
codegen_flags: <defaults>
</compile_context>

<pallas_src>
import jax
import jax.numpy as jnp
from jax import lax
from jax.experimental import pallas as pl
from jax.experimental.pallas import tpu as pltpu


# ----------------------------------------------------------------------------
# Helpers
# ----------------------------------------------------------------------------
def _round_up(x, m):
    return ((x + m - 1) // m) * m


def _pad_axis(a, axis, target):
    if a.shape[axis] == target:
        return a
    widths = [(0, 0)] * a.ndim
    widths[axis] = (0, target - a.shape[axis])
    return jnp.pad(a, widths)


def _pick_row_tile(ho, wo, c, n):
    """Rows per output strip: TH divides Ho, M = TH*Wo targeted in ~[256,1024],
    bounded by a ~48-vreg f32 accumulator (TH*Wo*C*4B <= ~192 KiB)."""
    vreg_cap = max(256, (48 * 1024) // max(c, 1))      # f32 elements of acc
    m_cap = min(1024, vreg_cap)
    th_cap = max(1, m_cap // max(wo, 1))
    if n == 1:                       # keep >= 2 strips so both v7x TCs get work
        th_cap = min(th_cap, max(1, ho // 2))
    th = 1
    for d in range(1, ho + 1):
        if ho % d == 0 and d <= th_cap:
            th = d
    # TODO(synk): prime Ho larger than th_cap degrades to TH=1 (perf cliff,
    #             not a correctness issue); would need masked partial strips.
    return th


# ----------------------------------------------------------------------------
# Fused DepthwiseSeparableConv block (Pallas), channels-last core
# ----------------------------------------------------------------------------
def dsconv_nhwc(x_nhwc, params, *, stride=1, lane_align=128):
    """Fused DW3x3 + BN + ReLU + PW1x1 + BN + ReLU.

    Input : (N, H, W, C_arr) NHWC, C_arr >= Cin; any lanes beyond Cin must be 0
            (which is exactly what this function's own padded output provides).
    Output: (N, Ho, Wo, Cpo) NHWC with Cout real channels and zero-padded lanes
            up to Cpo = round_up(Cout, 128)  (lane-dense output stores).
    """
    assert stride in (1, 2)
    N, H, W, C_arr = x_nhwc.shape
    Cin = params["w_dw"].shape[2]
    Cout = params["w_pw"].shape[1]
    assert C_arr >= Cin
    s = stride
    assert H % s == 0 and W % s == 0, "even H/W required for stride 2"
    Ho, Wo = H // s, W // s
    Cpo = _round_up(Cout, lane_align)

    # ---- Parameter prep: fold BN scales into the conv weights (eval BN). ----
    w_dw = (params["w_dw"] * params["scale1"][None, None, :]).astype(jnp.float32)
    w_pw = (params["w_pw"] * params["scale2"][None, :]).astype(jnp.float32)
    b1 = params["bias1"].astype(jnp.float32)
    b2 = params["bias2"].astype(jnp.float32)

    # Pad weight channel dims only (input activation stays at C_arr channels):
    # extra depthwise lanes are zero -> stay zero through DW+bias(0)+ReLU and
    # hit zero rows of w_pw, so padded lanes never contaminate real outputs.
    w_dw = _pad_axis(w_dw, 2, C_arr)
    b1 = _pad_axis(b1, 0, C_arr).reshape(1, 1, C_arr)
    w_pw = _pad_axis(_pad_axis(w_pw, 0, C_arr), 1, Cpo).astype(jnp.bfloat16)
    b2 = _pad_axis(b2, 0, Cpo).reshape(1, Cpo)

    # ---- Input prep: 1-px spatial halo; stride-2 -> space-to-depth planes. --
    x = x_nhwc.astype(jnp.float32)
    xp = jnp.pad(x, ((0, 0), (1, 1), (1, 1), (0, 0)))       # (N, H+2, W+2, C)
    if s == 1:
        planes = xp[:, None]                                 # (N, 1, H+2, W+2, C)
    else:
        Hp, Wp = H + 2, W + 2
        planes = xp.reshape(N, Hp // 2, 2, Wp // 2, 2, C_arr)
        planes = jnp.transpose(planes, (0, 2, 4, 1, 3, 5))   # (N, hp, wp, hb, wb, C)
        planes = planes.reshape(N, 4, Hp // 2, Wp // 2, C_arr)
    P, PH, PW = planes.shape[1], planes.shape[2], planes.shape[3]

    TH = _pick_row_tile(Ho, Wo, C_arr, N)
    R = Ho // TH

    def kernel(x_ref, wdw_ref, b1_ref, wpw_ref, b2_ref, o_ref):
        r = pl.program_id(1)
        row0 = pl.multiple_of(r * TH, TH)

        # Depthwise 3x3: 9 contiguous taps (parity plane + offset encode the
        # stride), accumulated in a vreg-resident f32 accumulator.
        w = wdw_ref[...]                                    # (3, 3, C_arr)
        acc = jnp.zeros((TH, Wo, C_arr), jnp.float32)
        for kh in range(3):
            for kw in range(3):
                if s == 1:
                    p, ro, co = 0, kh, kw
                else:
                    p, ro, co = 2 * (kh % 2) + (kw % 2), kh // 2, kw // 2
                tap = x_ref[0, p, pl.ds(row0 + ro, TH), pl.ds(co, Wo), :]
                acc = acc + tap * w[kh:kh + 1, kw:kw + 1, :]
        y = jnp.maximum(acc + b1_ref[...], 0.0)             # BN1 scale pre-folded

        # Pointwise 1x1 as a bf16 MXU matmul with f32 accumulation + BN2 + ReLU.
        yf = y.reshape(TH * Wo, C_arr).astype(jnp.bfloat16)
        z = jnp.dot(yf, wpw_ref[...], preferred_element_type=jnp.float32)
        z = jnp.maximum(z + b2_ref[...], 0.0)                # BN2 scale pre-folded
        o_ref[0] = z.reshape(TH, Wo, Cpo)

    # Rough per-call VMEM footprint; only raise the scoped limit if needed.
    in_block_bytes = P * PH * PW * C_arr * 4
    w_bytes = 9 * C_arr * 4 + C_arr * Cpo * 2 + (C_arr + Cpo) * 4
    out_block_bytes = TH * Wo * Cpo * 4
    est = 2 * (in_block_bytes + w_bytes + out_block_bytes) + (2 << 20)
    cparams = dict(dimension_semantics=("parallel", "parallel"))
    if est > (32 << 20):
        cparams["vmem_limit_bytes"] = int(min(est, 120 << 20))

    out = pl.pallas_call(
        kernel,
        out_shape=jax.ShapeDtypeStruct((N, Ho, Wo, Cpo), jnp.float32),
        grid=(N, R),
        in_specs=[
            # Full (haloed / parity-split) image per batch element; block index
            # is constant across the strip axis so it is DMA'd once per image.
            pl.BlockSpec((1, P, PH, PW, C_arr), lambda n, r: (n, 0, 0, 0, 0)),
            pl.BlockSpec((3, 3, C_arr), lambda n, r: (0, 0, 0)),
            pl.BlockSpec((1, 1, C_arr), lambda n, r: (0, 0, 0)),
            pl.BlockSpec((C_arr, Cpo), lambda n, r: (0, 0)),
            pl.BlockSpec((1, Cpo), lambda n, r: (0, 0)),
        ],
        out_specs=pl.BlockSpec((1, TH, Wo, Cpo), lambda n, r: (n, r, 0, 0)),
        compiler_params=pltpu.CompilerParams(**cparams),
    )(planes, w_dw, b1, w_pw, b2)
    return out


def depthwise_separable_conv(x_nchw, params, *, stride=1):
    """Standalone NCHW-in / NCHW-out wrapper around the fused NHWC block."""
    cout = params["w_pw"].shape[1]
    y = dsconv_nhwc(jnp.transpose(x_nchw, (0, 2, 3, 1)), params, stride=stride)
    return jnp.transpose(y[..., :cout], (0, 3, 1, 2))


# ----------------------------------------------------------------------------
# Deterministic synthetic parameters (eval-mode BN folded to scale/bias)
# ----------------------------------------------------------------------------
def init_block_params(key, in_c, out_c):
    eps = 1e-5
    k1, k2, k3, k4 = jax.random.split(key, 4)

    def folded_bn(k, c):
        kg, kb, km, kv = jax.random.split(k, 4)
        gamma = 1.0 + 0.1 * jax.random.normal(kg, (c,), jnp.float32)
        beta = 0.1 * jax.random.normal(kb, (c,), jnp.float32)
        mean = 0.1 * jax.random.normal(km, (c,), jnp.float32)
        var = 1.0 + 0.2 * jax.random.uniform(kv, (c,), jnp.float32)
        scale = gamma / jnp.sqrt(var + eps)
        return scale, beta - mean * scale

    w_dw = 0.3 * jax.random.normal(k1, (3, 3, in_c), jnp.float32)
    w_pw = jax.random.normal(k2, (in_c, out_c), jnp.float32) / jnp.sqrt(float(in_c))
    s1, b1 = folded_bn(k3, in_c)
    s2, b2 = folded_bn(k4, out_c)
    return dict(w_dw=w_dw, w_pw=w_pw, scale1=s1, bias1=b1, scale2=s2, bias2=b2)


# ----------------------------------------------------------------------------
# Pure-JAX reference (NCHW, mirrors the PyTorch module in eval mode)
# ----------------------------------------------------------------------------
def reference_block(x, p, stride):
    x = x.astype(jnp.float32)
    c_in = p["w_dw"].shape[2]
    w_dw = jnp.transpose(p["w_dw"], (2, 0, 1))[:, None, :, :]       # (Cin,1,3,3)
    y = lax.conv_general_dilated(
        x, w_dw, (stride, stride), ((1, 1), (1, 1)),
        dimension_numbers=("NCHW", "OIHW", "NCHW"),
        feature_group_count=c_in)
    y = y * p["scale1"][None, :, None, None] + p["bias1"][None, :, None, None]
    y = jnp.maximum(y, 0.0)
    w_pw = jnp.transpose(p["w_pw"], (1, 0))[:, :, None, None]       # (Cout,Cin,1,1)
    y = lax.conv_general_dilated(
        y, w_pw, (1, 1), "VALID",
        dimension_numbers=("NCHW", "OIHW", "NCHW"))
    y = y * p["scale2"][None, :, None, None] + p["bias2"][None, :, None, None]
    return jnp.maximum(y, 0.0)


if __name__ == "__main__":
    key = jax.random.PRNGKey(0)
    kp1, kp2, kx = jax.random.split(key, 3)

    # Two chained blocks, one stride-1 and one stride-2 (MobileNet pattern).
    p1 = init_block_params(kp1, 16, 32)   # 16 -> 32, stride 1
    p2 = init_block_params(kp2, 32, 64)   # 32 -> 64, stride 2
    x = jax.random.normal(kx, (2, 16, 16, 16), jnp.float32)   # NCHW

    @jax.jit
    def forward(inp):
        # Convert to channels-last once; keep the padded channels-last layout
        # between the blocks (no per-block transpose / channel-slice plumbing).
        h = jnp.transpose(inp, (0, 2, 3, 1))
        h = dsconv_nhwc(h, p1, stride=1)          # (N, 16, 16, 128), 32 real
        h = dsconv_nhwc(h, p2, stride=2)          # (N,  8,  8, 128), 64 real
        h = h[..., :p2["w_pw"].shape[1]]
        return jnp.transpose(h, (0, 3, 1, 2))     # NHWC -> NCHW once

    out = jax.block_until_ready(forward(x))
    assert out.shape == (2, 64, 8, 8), out.shape

    ref = reference_block(reference_block(x, p1, 1), p2, 2)
    if not jnp.allclose(out, ref, rtol=2e-2, atol=2e-2):
        max_err = float(jnp.max(jnp.abs(out - ref)))
        raise AssertionError(f"Pallas output mismatch vs reference, max_err={max_err}")

    print("KERNEL_OK")
</pallas_src>

<mosaic_0001>
module attributes {stable_mosaic.version = 11 : i64} {
  func.func @kernel(%arg0: i32, %arg1: i32, %arg2: memref<1x1x18x18x16xf32, #tpu.memory_space<vmem>>, %arg3: memref<3x3x16xf32, #tpu.memory_space<vmem>>, %arg4: memref<1x1x16xf32, #tpu.memory_space<vmem>>, %arg5: memref<16x128xbf16, #tpu.memory_space<vmem>>, %arg6: memref<1x128xf32, #tpu.memory_space<vmem>>, %arg7: memref<1x16x16x128xf32, #tpu.memory_space<vmem>>) attributes {dimension_semantics = [#tpu.dimension_semantics<parallel>, #tpu.dimension_semantics<parallel>], iteration_bounds = array<i64: 2, 1>, scalar_prefetch = 0 : i64, scratch_operands = 0 : i64, tpu.core_type = #tpu.core_type<tc>, window_params = [{transform_indices = @transform_0, window_bounds = array<i64: 1, 1, 18, 18, 16>}, {pipeline_mode = #tpu.pipeline_mode<synchronous>, transform_indices = @transform_1, window_bounds = array<i64: 3, 3, 16>}, {pipeline_mode = #tpu.pipeline_mode<synchronous>, transform_indices = @transform_2, window_bounds = array<i64: 1, 1, 16>}, {pipeline_mode = #tpu.pipeline_mode<synchronous>, transform_indices = @transform_3, window_bounds = array<i64: 16, 128>}, {pipeline_mode = #tpu.pipeline_mode<synchronous>, transform_indices = @transform_4, window_bounds = array<i64: 1, 128>}, {transform_indices = @transform_5, window_bounds = array<i64: 1, 16, 16, 128>}]} {
    %c16_i32 = arith.constant 16 : i32
    %0 = arith.muli %arg1, %c16_i32 : i32
    %1 = tpu.assume_multiple %0, 16 : i32
    %c0 = arith.constant 0 : index
    %c0_0 = arith.constant 0 : index
    %c0_1 = arith.constant 0 : index
    %2 = vector.load %arg3[%c0, %c0_0, %c0_1] : memref<3x3x16xf32, #tpu.memory_space<vmem>>, vector<3x3x16xf32>
    %cst = arith.constant 0.000000e+00 : f32
    %3 = vector.broadcast %cst : f32 to vector<16x16x16xf32>
    %c0_i32 = arith.constant 0 : i32
    %4 = arith.addi %1, %c0_i32 : i32
    %c0_2 = arith.constant 0 : index
    %c0_3 = arith.constant 0 : index
    %5 = arith.index_cast %4 : i32 to index
    %c0_4 = arith.constant 0 : index
    %c0_5 = arith.constant 0 : index
    %6 = vector.load %arg2[%c0_2, %c0_3, %5, %c0_4, %c0_5] : memref<1x1x18x18x16xf32, #tpu.memory_space<vmem>>, vector<1x1x16x16x16xf32>
    %7 = vector.shape_cast %6 : vector<1x1x16x16x16xf32> to vector<16x16x16xf32>
    %8 = vector.extract_strided_slice %2 {offsets = [0, 0, 0], sizes = [1, 1, 16], strides = [1, 1, 1]} : vector<3x3x16xf32> to vector<1x1x16xf32>
    %9 = vector.broadcast %8 : vector<1x1x16xf32> to vector<16x16x16xf32>
    %10 = arith.mulf %7, %9 : vector<16x16x16xf32>
    %11 = arith.addf %3, %10 : vector<16x16x16xf32>
    %c0_i32_6 = arith.constant 0 : i32
    %12 = arith.addi %1, %c0_i32_6 : i32
    %c0_7 = arith.constant 0 : index
    %c0_8 = arith.constant 0 : index
    %13 = arith.index_cast %12 : i32 to index
    %c1 = arith.constant 1 : index
    %c0_9 = arith.constant 0 : index
    %14 = vector.load %arg2[%c0_7, %c0_8, %13, %c1, %c0_9] : memref<1x1x18x18x16xf32, #tpu.memory_space<vmem>>, vector<1x1x16x16x16xf32>
    %15 = vector.shape_cast %14 : vector<1x1x16x16x16xf32> to vector<16x16x16xf32>
    %16 = vector.extract_strided_slice %2 {offsets = [0, 1, 0], sizes = [1, 1, 16], strides = [1, 1, 1]} : vector<3x3x16xf32> to vector<1x1x16xf32>
    %17 = vector.broadcast %16 : vector<1x1x16xf32> to vector<16x16x16xf32>
    %18 = arith.mulf %15, %17 : vector<16x16x16xf32>
    %19 = arith.addf %11, %18 : vector<16x16x16xf32>
    %c0_i32_10 = arith.constant 0 : i32
    %20 = arith.addi %1, %c0_i32_10 : i32
    %c0_11 = arith.constant 0 : index
    %c0_12 = arith.constant 0 : index
    %21 = arith.index_cast %20 : i32 to index
    %c2 = arith.constant 2 : index
    %c0_13 = arith.constant 0 : index
    %22 = vector.load %arg2[%c0_11, %c0_12, %21, %c2, %c0_13] : memref<1x1x18x18x16xf32, #tpu.memory_space<vmem>>, vector<1x1x16x16x16xf32>
    %23 = vector.shape_cast %22 : vector<1x1x16x16x16xf32> to vector<16x16x16xf32>
    %24 = vector.extract_strided_slice %2 {offsets = [0, 2, 0], sizes = [1, 1, 16], strides = [1, 1, 1]} : vector<3x3x16xf32> to vector<1x1x16xf32>
    %25 = vector.broadcast %24 : vector<1x1x16xf32> to vector<16x16x16xf32>
    %26 = arith.mulf %23, %25 : vector<16x16x16xf32>
    %27 = arith.addf %19, %26 : vector<16x16x16xf32>
    %c1_i32 = arith.constant 1 : i32
    %28 = arith.addi %1, %c1_i32 : i32
    %c0_14 = arith.constant 0 : index
    %c0_15 = arith.constant 0 : index
    %29 = arith.index_cast %28 : i32 to index
    %c0_16 = arith.constant 0 : index
    %c0_17 = arith.constant 0 : index
    %30 = vector.load %arg2[%c0_14, %c0_15, %29, %c0_16, %c0_17] : memref<1x1x18x18x16xf32, #tpu.memory_space<vmem>>, vector<1x1x16x16x16xf32>
    %31 = vector.shape_cast %30 : vector<1x1x16x16x16xf32> to vector<16x16x16xf32>
    %32 = vector.extract_strided_slice %2 {offsets = [1, 0, 0], sizes = [1, 1, 16], strides = [1, 1, 1]} : vector<3x3x16xf32> to vector<1x1x16xf32>
    %33 = vector.broadcast %32 : vector<1x1x16xf32> to vector<16x16x16xf32>
    %34 = arith.mulf %31, %33 : vector<16x16x16xf32>
    %35 = arith.addf %27, %34 : vector<16x16x16xf32>
    %c1_i32_18 = arith.constant 1 : i32
    %36 = arith.addi %1, %c1_i32_18 : i32
    %c0_19 = arith.constant 0 : index
    %c0_20 = arith.constant 0 : index
    %37 = arith.index_cast %36 : i32 to index
    %c1_21 = arith.constant 1 : index
    %c0_22 = arith.constant 0 : index
    %38 = vector.load %arg2[%c0_19, %c0_20, %37, %c1_21, %c0_22] : memref<1x1x18x18x16xf32, #tpu.memory_space<vmem>>, vector<1x1x16x16x16xf32>
    %39 = vector.shape_cast %38 : vector<1x1x16x16x16xf32> to vector<16x16x16xf32>
    %40 = vector.extract_strided_slice %2 {offsets = [1, 1, 0], sizes = [1, 1, 16], strides = [1, 1, 1]} : vector<3x3x16xf32> to vector<1x1x16xf32>
    %41 = vector.broadcast %40 : vector<1x1x16xf32> to vector<16x16x16xf32>
    %42 = arith.mulf %39, %41 : vector<16x16x16xf32>
    %43 = arith.addf %35, %42 : vector<16x16x16xf32>
    %c1_i32_23 = arith.constant 1 : i32
    %44 = arith.addi %1, %c1_i32_23 : i32
    %c0_24 = arith.constant 0 : index
    %c0_25 = arith.constant 0 : index
    %45 = arith.index_cast %44 : i32 to index
    %c2_26 = arith.constant 2 : index
    %c0_27 = arith.constant 0 : index
    %46 = vector.load %arg2[%c0_24, %c0_25, %45, %c2_26, %c0_27] : memref<1x1x18x18x16xf32, #tpu.memory_space<vmem>>, vector<1x1x16x16x16xf32>
    %47 = vector.shape_cast %46 : vector<1x1x16x16x16xf32> to vector<16x16x16xf32>
    %48 = vector.extract_strided_slice %2 {offsets = [1, 2, 0], sizes = [1, 1, 16], strides = [1, 1, 1]} : vector<3x3x16xf32> to vector<1x1x16xf32>
    %49 = vector.broadcast %48 : vector<1x1x16xf32> to vector<16x16x16xf32>
    %50 = arith.mulf %47, %49 : vector<16x16x16xf32>
    %51 = arith.addf %43, %50 : vector<16x16x16xf32>
    %c2_i32 = arith.constant 2 : i32
    %52 = arith.addi %1, %c2_i32 : i32
    %c0_28 = arith.constant 0 : index
    %c0_29 = arith.constant 0 : index
    %53 = arith.index_cast %52 : i32 to index
    %c0_30 = arith.constant 0 : index
    %c0_31 = arith.constant 0 : index
    %54 = vector.load %arg2[%c0_28, %c0_29, %53, %c0_30, %c0_31] : memref<1x1x18x18x16xf32, #tpu.memory_space<vmem>>, vector<1x1x16x16x16xf32>
    %55 = vector.shape_cast %54 : vector<1x1x16x16x16xf32> to vector<16x16x16xf32>
    %56 = vector.extract_strided_slice %2 {offsets = [2, 0, 0], sizes = [1, 1, 16], strides = [1, 1, 1]} : vector<3x3x16xf32> to vector<1x1x16xf32>
    %57 = vector.broadcast %56 : vector<1x1x16xf32> to vector<16x16x16xf32>
    %58 = arith.mulf %55, %57 : vector<16x16x16xf32>
    %59 = arith.addf %51, %58 : vector<16x16x16xf32>
    %c2_i32_32 = arith.constant 2 : i32
    %60 = arith.addi %1, %c2_i32_32 : i32
    %c0_33 = arith.constant 0 : index
    %c0_34 = arith.constant 0 : index
    %61 = arith.index_cast %60 : i32 to index
    %c1_35 = arith.constant 1 : index
    %c0_36 = arith.constant 0 : index
    %62 = vector.load %arg2[%c0_33, %c0_34, %61, %c1_35, %c0_36] : memref<1x1x18x18x16xf32, #tpu.memory_space<vmem>>, vector<1x1x16x16x16xf32>
    %63 = vector.shape_cast %62 : vector<1x1x16x16x16xf32> to vector<16x16x16xf32>
    %64 = vector.extract_strided_slice %2 {offsets = [2, 1, 0], sizes = [1, 1, 16], strides = [1, 1, 1]} : vector<3x3x16xf32> to vector<1x1x16xf32>
    %65 = vector.broadcast %64 : vector<1x1x16xf32> to vector<16x16x16xf32>
    %66 = arith.mulf %63, %65 : vector<16x16x16xf32>
    %67 = arith.addf %59, %66 : vector<16x16x16xf32>
    %c2_i32_37 = arith.constant 2 : i32
    %68 = arith.addi %1, %c2_i32_37 : i32
    %c0_38 = arith.constant 0 : index
    %c0_39 = arith.constant 0 : index
    %69 = arith.index_cast %68 : i32 to index
    %c2_40 = arith.constant 2 : index
    %c0_41 = arith.constant 0 : index
    %70 = vector.load %arg2[%c0_38, %c0_39, %69, %c2_40, %c0_41] : memref<1x1x18x18x16xf32, #tpu.memory_space<vmem>>, vector<1x1x16x16x16xf32>
    %71 = vector.shape_cast %70 : vector<1x1x16x16x16xf32> to vector<16x16x16xf32>
    %72 = vector.extract_strided_slice %2 {offsets = [2, 2, 0], sizes = [1, 1, 16], strides = [1, 1, 1]} : vector<3x3x16xf32> to vector<1x1x16xf32>
    %73 = vector.broadcast %72 : vector<1x1x16xf32> to vector<16x16x16xf32>
    %74 = arith.mulf %71, %73 : vector<16x16x16xf32>
    %75 = arith.addf %67, %74 : vector<16x16x16xf32>
    %c0_42 = arith.constant 0 : index
    %c0_43 = arith.constant 0 : index
    %c0_44 = arith.constant 0 : index
    %76 = vector.load %arg4[%c0_42, %c0_43, %c0_44] : memref<1x1x16xf32, #tpu.memory_space<vmem>>, vector<1x1x16xf32>
    %77 = vector.broadcast %76 : vector<1x1x16xf32> to vector<16x16x16xf32>
    %78 = arith.addf %75, %77 : vector<16x16x16xf32>
    %cst_45 = arith.constant 0.000000e+00 : f32
    %79 = vector.broadcast %cst_45 : f32 to vector<16x16x16xf32>
    %80 = arith.maximumf %78, %79 : vector<16x16x16xf32>
    %81 = vector.shape_cast %80 : vector<16x16x16xf32> to vector<256x16xf32>
    %82 = arith.truncf %81 : vector<256x16xf32> to vector<256x16xbf16>
    %c0_46 = arith.constant 0 : index
    %c0_47 = arith.constant 0 : index
    %83 = vector.load %arg5[%c0_46, %c0_47] : memref<16x128xbf16, #tpu.memory_space<vmem>>, vector<16x128xbf16>
    %cst_48 = arith.constant dense<0.000000e+00> : vector<256x128xf32>
    %84 = tpu.matmul %82, %83, %cst_48 {dimension_numbers = #tpu.dot_dimension_numbers<[1], [0], [0], [1], [0, 0, 1, 1], [], []>} : vector<256x16xbf16>, vector<16x128xbf16>, vector<256x128xf32> -> vector<256x128xf32>
    %c0_49 = arith.constant 0 : index
    %c0_50 = arith.constant 0 : index
    %85 = vector.load %arg6[%c0_49, %c0_50] : memref<1x128xf32, #tpu.memory_space<vmem>>, vector<1x128xf32>
    %86 = vector.broadcast %85 : vector<1x128xf32> to vector<256x128xf32>
    %87 = arith.addf %84, %86 : vector<256x128xf32>
    %cst_51 = arith.constant 0.000000e+00 : f32
    %88 = vector.broadcast %cst_51 : f32 to vector<256x128xf32>
    %89 = arith.maximumf %87, %88 : vector<256x128xf32>
    %90 = vector.shape_cast %89 : vector<256x128xf32> to vector<16x16x128xf32>
    %c0_52 = arith.constant 0 : index
    %c0_53 = arith.constant 0 : index
    %c0_54 = arith.constant 0 : index
    %c0_55 = arith.constant 0 : index
    %91 = vector.load %arg7[%c0_52, %c0_53, %c0_54, %c0_55] : memref<1x16x16x128xf32, #tpu.memory_space<vmem>>, vector<1x16x16x128xf32>
    %92 = vector.shape_cast %91 : vector<1x16x16x128xf32> to vector<16x16x128xf32>
    %93 = vector.shape_cast %90 : vector<16x16x128xf32> to vector<1x16x16x128xf32>
    tpu.vector_store %arg7[%c0_52, %c0_53, %c0_54, %c0_55], %93 {strides = array<i32>} : memref<1x16x16x128xf32, #tpu.memory_space<vmem>>, vector<1x16x16x128xf32>,
    return
  }
  func.func @transform_0(%arg0: i32, %arg1: i32) -> (i32, i32, i32, i32, i32) {
    %c0_i32 = arith.constant 0 : i32
    %c0_i32_0 = arith.constant 0 : i32
    %c0_i32_1 = arith.constant 0 : i32
    %c0_i32_2 = arith.constant 0 : i32
    %c0_i32_3 = arith.constant 0 : i32
    return %arg0, %c0_i32, %c0_i32_0, %c0_i32_1, %c0_i32_2 : i32, i32, i32, i32, i32
  }
  func.func @transform_1(%arg0: i32, %arg1: i32) -> (i32, i32, i32) {
    %c0_i32 = arith.constant 0 : i32
    %c0_i32_0 = arith.constant 0 : i32
    %c0_i32_1 = arith.constant 0 : i32
    %c0_i32_2 = arith.constant 0 : i32
    return %c0_i32, %c0_i32_0, %c0_i32_1 : i32, i32, i32
  }
  func.func @transform_2(%arg0: i32, %arg1: i32) -> (i32, i32, i32) {
    %c0_i32 = arith.constant 0 : i32
    %c0_i32_0 = arith.constant 0 : i32
    %c0_i32_1 = arith.constant 0 : i32
    %c0_i32_2 = arith.constant 0 : i32
    return %c0_i32, %c0_i32_0, %c0_i32_1 : i32, i32, i32
  }
  func.func @transform_3(%arg0: i32, %arg1: i32) -> (i32, i32) {
    %c0_i32 = arith.constant 0 : i32
    %c0_i32_0 = arith.constant 0 : i32
    %c0_i32_1 = arith.constant 0 : i32
    return %c0_i32, %c0_i32_0 : i32, i32
  }
  func.func @transform_4(%arg0: i32, %arg1: i32) -> (i32, i32) {
    %c0_i32 = arith.constant 0 : i32
    %c0_i32_0 = arith.constant 0 : i32
    %c0_i32_1 = arith.constant 0 : i32
    return %c0_i32, %c0_i32_0 : i32, i32
  }
  func.func @transform_5(%arg0: i32, %arg1: i32) -> (i32, i32, i32, i32) {
    %c0_i32 = arith.constant 0 : i32
    %c0_i32_0 = arith.constant 0 : i32
    %c0_i32_1 = arith.constant 0 : i32
    return %arg0, %arg1, %c0_i32, %c0_i32_0 : i32, i32, i32, i32
  }
}

module attributes {stable_mosaic.version = 11 : i64} {
  func.func @kernel(%arg0: i32, %arg1: i32, %arg2: memref<1x4x9x9x128xf32, #tpu.memory_space<vmem>>, %arg3: memref<3x3x128xf32, #tpu.memory_space<vmem>>, %arg4: memref<1x1x128xf32, #tpu.memory_space<vmem>>, %arg5: memref<128x128xbf16, #tpu.memory_space<vmem>>, %arg6: memref<1x128xf32, #tpu.memory_space<vmem>>, %arg7: memref<1x8x8x128xf32, #tpu.memory_space<vmem>>) attributes {dimension_semantics = [#tpu.dimension_semantics<parallel>, #tpu.dimension_semantics<parallel>], iteration_bounds = array<i64: 2, 1>, scalar_prefetch = 0 : i64, scratch_operands = 0 : i64, tpu.core_type = #tpu.core_type<tc>, window_params = [{transform_indices = @transform_0, window_bounds = array<i64: 1, 4, 9, 9, 128>}, {pipeline_mode = #tpu.pipeline_mode<synchronous>, transform_indices = @transform_1, window_bounds = array<i64: 3, 3, 128>}, {pipeline_mode = #tpu.pipeline_mode<synchronous>, transform_indices = @transform_2, window_bounds = array<i64: 1, 1, 128>}, {pipeline_mode = #tpu.pipeline_mode<synchronous>, transform_indices = @transform_3, window_bounds = array<i64: 128, 128>}, {pipeline_mode = #tpu.pipeline_mode<synchronous>, transform_indices = @transform_4, window_bounds = array<i64: 1, 128>}, {transform_indices = @transform_5, window_bounds = array<i64: 1, 8, 8, 128>}]} {
    %c8_i32 = arith.constant 8 : i32
    %0 = arith.muli %arg1, %c8_i32 : i32
    %1 = tpu.assume_multiple %0, 8 : i32
    %c0 = arith.constant 0 : index
    %c0_0 = arith.constant 0 : index
    %c0_1 = arith.constant 0 : index
    %2 = vector.load %arg3[%c0, %c0_0, %c0_1] : memref<3x3x128xf32, #tpu.memory_space<vmem>>, vector<3x3x128xf32>
    %cst = arith.constant 0.000000e+00 : f32
    %3 = vector.broadcast %cst : f32 to vector<8x8x128xf32>
    %c0_i32 = arith.constant 0 : i32
    %4 = arith.addi %1, %c0_i32 : i32
    %c0_2 = arith.constant 0 : index
    %c0_3 = arith.constant 0 : index
    %5 = arith.index_cast %4 : i32 to index
    %c0_4 = arith.constant 0 : index
    %c0_5 = arith.constant 0 : index
    %6 = vector.load %arg2[%c0_2, %c0_3, %5, %c0_4, %c0_5] : memref<1x4x9x9x128xf32, #tpu.memory_space<vmem>>, vector<1x1x8x8x128xf32>
    %7 = vector.shape_cast %6 : vector<1x1x8x8x128xf32> to vector<8x8x128xf32>
    %8 = vector.extract_strided_slice %2 {offsets = [0, 0, 0], sizes = [1, 1, 128], strides = [1, 1, 1]} : vector<3x3x128xf32> to vector<1x1x128xf32>
    %9 = vector.broadcast %8 : vector<1x1x128xf32> to vector<8x8x128xf32>
    %10 = arith.mulf %7, %9 : vector<8x8x128xf32>
    %11 = arith.addf %3, %10 : vector<8x8x128xf32>
    %c0_i32_6 = arith.constant 0 : i32
    %12 = arith.addi %1, %c0_i32_6 : i32
    %c0_7 = arith.constant 0 : index
    %c1 = arith.constant 1 : index
    %13 = arith.index_cast %12 : i32 to index
    %c0_8 = arith.constant 0 : index
    %c0_9 = arith.constant 0 : index
    %14 = vector.load %arg2[%c0_7, %c1, %13, %c0_8, %c0_9] : memref<1x4x9x9x128xf32, #tpu.memory_space<vmem>>, vector<1x1x8x8x128xf32>
    %15 = vector.shape_cast %14 : vector<1x1x8x8x128xf32> to vector<8x8x128xf32>
    %16 = vector.extract_strided_slice %2 {offsets = [0, 1, 0], sizes = [1, 1, 128], strides = [1, 1, 1]} : vector<3x3x128xf32> to vector<1x1x128xf32>
    %17 = vector.broadcast %16 : vector<1x1x128xf32> to vector<8x8x128xf32>
    %18 = arith.mulf %15, %17 : vector<8x8x128xf32>
    %19 = arith.addf %11, %18 : vector<8x8x128xf32>
    %c0_i32_10 = arith.constant 0 : i32
    %20 = arith.addi %1, %c0_i32_10 : i32
    %c0_11 = arith.constant 0 : index
    %c0_12 = arith.constant 0 : index
    %21 = arith.index_cast %20 : i32 to index
    %c1_13 = arith.constant 1 : index
    %c0_14 = arith.constant 0 : index
    %22 = vector.load %arg2[%c0_11, %c0_12, %21, %c1_13, %c0_14] : memref<1x4x9x9x128xf32, #tpu.memory_space<vmem>>, vector<1x1x8x8x128xf32>
    %23 = vector.shape_cast %22 : vector<1x1x8x8x128xf32> to vector<8x8x128xf32>
    %24 = vector.extract_strided_slice %2 {offsets = [0, 2, 0], sizes = [1, 1, 128], strides = [1, 1, 1]} : vector<3x3x128xf32> to vector<1x1x128xf32>
    %25 = vector.broadcast %24 : vector<1x1x128xf32> to vector<8x8x128xf32>
    %26 = arith.mulf %23, %25 : vector<8x8x128xf32>
    %27 = arith.addf %19, %26 : vector<8x8x128xf32>
    %c0_i32_15 = arith.constant 0 : i32
    %28 = arith.addi %1, %c0_i32_15 : i32
    %c0_16 = arith.constant 0 : index
    %c2 = arith.constant 2 : index
    %29 = arith.index_cast %28 : i32 to index
    %c0_17 = arith.constant 0 : index
    %c0_18 = arith.constant 0 : index
    %30 = vector.load %arg2[%c0_16, %c2, %29, %c0_17, %c0_18] : memref<1x4x9x9x128xf32, #tpu.memory_space<vmem>>, vector<1x1x8x8x128xf32>
    %31 = vector.shape_cast %30 : vector<1x1x8x8x128xf32> to vector<8x8x128xf32>
    %32 = vector.extract_strided_slice %2 {offsets = [1, 0, 0], sizes = [1, 1, 128], strides = [1, 1, 1]} : vector<3x3x128xf32> to vector<1x1x128xf32>
    %33 = vector.broadcast %32 : vector<1x1x128xf32> to vector<8x8x128xf32>
    %34 = arith.mulf %31, %33 : vector<8x8x128xf32>
    %35 = arith.addf %27, %34 : vector<8x8x128xf32>
    %c0_i32_19 = arith.constant 0 : i32
    %36 = arith.addi %1, %c0_i32_19 : i32
    %c0_20 = arith.constant 0 : index
    %c3 = arith.constant 3 : index
    %37 = arith.index_cast %36 : i32 to index
    %c0_21 = arith.constant 0 : index
    %c0_22 = arith.constant 0 : index
    %38 = vector.load %arg2[%c0_20, %c3, %37, %c0_21, %c0_22] : memref<1x4x9x9x128xf32, #tpu.memory_space<vmem>>, vector<1x1x8x8x128xf32>
    %39 = vector.shape_cast %38 : vector<1x1x8x8x128xf32> to vector<8x8x128xf32>
    %40 = vector.extract_strided_slice %2 {offsets = [1, 1, 0], sizes = [1, 1, 128], strides = [1, 1, 1]} : vector<3x3x128xf32> to vector<1x1x128xf32>
    %41 = vector.broadcast %40 : vector<1x1x128xf32> to vector<8x8x128xf32>
    %42 = arith.mulf %39, %41 : vector<8x8x128xf32>
    %43 = arith.addf %35, %42 : vector<8x8x128xf32>
    %c0_i32_23 = arith.constant 0 : i32
    %44 = arith.addi %1, %c0_i32_23 : i32
    %c0_24 = arith.constant 0 : index
    %c2_25 = arith.constant 2 : index
    %45 = arith.index_cast %44 : i32 to index
    %c1_26 = arith.constant 1 : index
    %c0_27 = arith.constant 0 : index
    %46 = vector.load %arg2[%c0_24, %c2_25, %45, %c1_26, %c0_27] : memref<1x4x9x9x128xf32, #tpu.memory_space<vmem>>, vector<1x1x8x8x128xf32>
    %47 = vector.shape_cast %46 : vector<1x1x8x8x128xf32> to vector<8x8x128xf32>
    %48 = vector.extract_strided_slice %2 {offsets = [1, 2, 0], sizes = [1, 1, 128], strides = [1, 1, 1]} : vector<3x3x128xf32> to vector<1x1x128xf32>
    %49 = vector.broadcast %48 : vector<1x1x128xf32> to vector<8x8x128xf32>
    %50 = arith.mulf %47, %49 : vector<8x8x128xf32>
    %51 = arith.addf %43, %50 : vector<8x8x128xf32>
    %c1_i32 = arith.constant 1 : i32
    %52 = arith.addi %1, %c1_i32 : i32
    %c0_28 = arith.constant 0 : index
    %c0_29 = arith.constant 0 : index
    %53 = arith.index_cast %52 : i32 to index
    %c0_30 = arith.constant 0 : index
    %c0_31 = arith.constant 0 : index
    %54 = vector.load %arg2[%c0_28, %c0_29, %53, %c0_30, %c0_31] : memref<1x4x9x9x128xf32, #tpu.memory_space<vmem>>, vector<1x1x8x8x128xf32>
    %55 = vector.shape_cast %54 : vector<1x1x8x8x128xf32> to vector<8x8x128xf32>
    %56 = vector.extract_strided_slice %2 {offsets = [2, 0, 0], sizes = [1, 1, 128], strides = [1, 1, 1]} : vector<3x3x128xf32> to vector<1x1x128xf32>
    %57 = vector.broadcast %56 : vector<1x1x128xf32> to vector<8x8x128xf32>
    %58 = arith.mulf %55, %57 : vector<8x8x128xf32>
    %59 = arith.addf %51, %58 : vector<8x8x128xf32>
    %c1_i32_32 = arith.constant 1 : i32
    %60 = arith.addi %1, %c1_i32_32 : i32
    %c0_33 = arith.constant 0 : index
    %c1_34 = arith.constant 1 : index
    %61 = arith.index_cast %60 : i32 to index
    %c0_35 = arith.constant 0 : index
    %c0_36 = arith.constant 0 : index
    %62 = vector.load %arg2[%c0_33, %c1_34, %61, %c0_35, %c0_36] : memref<1x4x9x9x128xf32, #tpu.memory_space<vmem>>, vector<1x1x8x8x128xf32>
    %63 = vector.shape_cast %62 : vector<1x1x8x8x128xf32> to vector<8x8x128xf32>
    %64 = vector.extract_strided_slice %2 {offsets = [2, 1, 0], sizes = [1, 1, 128], strides = [1, 1, 1]} : vector<3x3x128xf32> to vector<1x1x128xf32>
    %65 = vector.broadcast %64 : vector<1x1x128xf32> to vector<8x8x128xf32>
    %66 = arith.mulf %63, %65 : vector<8x8x128xf32>
    %67 = arith.addf %59, %66 : vector<8x8x128xf32>
    %c1_i32_37 = arith.constant 1 : i32
    %68 = arith.addi %1, %c1_i32_37 : i32
    %c0_38 = arith.constant 0 : index
    %c0_39 = arith.constant 0 : index
    %69 = arith.index_cast %68 : i32 to index
    %c1_40 = arith.constant 1 : index
    %c0_41 = arith.constant 0 : index
    %70 = vector.load %arg2[%c0_38, %c0_39, %69, %c1_40, %c0_41] : memref<1x4x9x9x128xf32, #tpu.memory_space<vmem>>, vector<1x1x8x8x128xf32>
    %71 = vector.shape_cast %70 : vector<1x1x8x8x128xf32> to vector<8x8x128xf32>
    %72 = vector.extract_strided_slice %2 {offsets = [2, 2, 0], sizes = [1, 1, 128], strides = [1, 1, 1]} : vector<3x3x128xf32> to vector<1x1x128xf32>
    %73 = vector.broadcast %72 : vector<1x1x128xf32> to vector<8x8x128xf32>
    %74 = arith.mulf %71, %73 : vector<8x8x128xf32>
    %75 = arith.addf %67, %74 : vector<8x8x128xf32>
    %c0_42 = arith.constant 0 : index
    %c0_43 = arith.constant 0 : index
    %c0_44 = arith.constant 0 : index
    %76 = vector.load %arg4[%c0_42, %c0_43, %c0_44] : memref<1x1x128xf32, #tpu.memory_space<vmem>>, vector<1x1x128xf32>
    %77 = vector.broadcast %76 : vector<1x1x128xf32> to vector<8x8x128xf32>
    %78 = arith.addf %75, %77 : vector<8x8x128xf32>
    %cst_45 = arith.constant 0.000000e+00 : f32
    %79 = vector.broadcast %cst_45 : f32 to vector<8x8x128xf32>
    %80 = arith.maximumf %78, %79 : vector<8x8x128xf32>
    %81 = vector.shape_cast %80 : vector<8x8x128xf32> to vector<64x128xf32>
    %82 = arith.truncf %81 : vector<64x128xf32> to vector<64x128xbf16>
    %c0_46 = arith.constant 0 : index
    %c0_47 = arith.constant 0 : index
    %83 = vector.load %arg5[%c0_46, %c0_47] : memref<128x128xbf16, #tpu.memory_space<vmem>>, vector<128x128xbf16>
    %cst_48 = arith.constant dense<0.000000e+00> : vector<64x128xf32>
    %84 = tpu.matmul %82, %83, %cst_48 {dimension_numbers = #tpu.dot_dimension_numbers<[1], [0], [0], [1], [0, 0, 1, 1], [], []>} : vector<64x128xbf16>, vector<128x128xbf16>, vector<64x128xf32> -> vector<64x128xf32>
    %c0_49 = arith.constant 0 : index
    %c0_50 = arith.constant 0 : index
    %85 = vector.load %arg6[%c0_49, %c0_50] : memref<1x128xf32, #tpu.memory_space<vmem>>, vector<1x128xf32>
    %86 = vector.broadcast %85 : vector<1x128xf32> to vector<64x128xf32>
    %87 = arith.addf %84, %86 : vector<64x128xf32>
    %cst_51 = arith.constant 0.000000e+00 : f32
    %88 = vector.broadcast %cst_51 : f32 to vector<64x128xf32>
    %89 = arith.maximumf %87, %88 : vector<64x128xf32>
    %90 = vector.shape_cast %89 : vector<64x128xf32> to vector<8x8x128xf32>
    %c0_52 = arith.constant 0 : index
    %c0_53 = arith.constant 0 : index
    %c0_54 = arith.constant 0 : index
    %c0_55 = arith.constant 0 : index
    %91 = vector.load %arg7[%c0_52, %c0_53, %c0_54, %c0_55] : memref<1x8x8x128xf32, #tpu.memory_space<vmem>>, vector<1x8x8x128xf32>
    %92 = vector.shape_cast %91 : vector<1x8x8x128xf32> to vector<8x8x128xf32>
    %93 = vector.shape_cast %90 : vector<8x8x128xf32> to vector<1x8x8x128xf32>
    tpu.vector_store %arg7[%c0_52, %c0_53, %c0_54, %c0_55], %93 {strides = array<i32>} : memref<1x8x8x128xf32, #tpu.memory_space<vmem>>, vector<1x8x8x128xf32>,
    return
  }
  func.func @transform_0(%arg0: i32, %arg1: i32) -> (i32, i32, i32, i32, i32) {
    %c0_i32 = arith.constant 0 : i32
    %c0_i32_0 = arith.constant 0 : i32
    %c0_i32_1 = arith.constant 0 : i32
    %c0_i32_2 = arith.constant 0 : i32
    %c0_i32_3 = arith.constant 0 : i32
    return %arg0, %c0_i32, %c0_i32_0, %c0_i32_1, %c0_i32_2 : i32, i32, i32, i32, i32
  }
  func.func @transform_1(%arg0: i32, %arg1: i32) -> (i32, i32, i32) {
    %c0_i32 = arith.constant 0 : i32
    %c0_i32_0 = arith.constant 0 : i32
    %c0_i32_1 = arith.constant 0 : i32
    %c0_i32_2 = arith.constant 0 : i32
    return %c0_i32, %c0_i32_0, %c0_i32_1 : i32, i32, i32
  }
  func.func @transform_2(%arg0: i32, %arg1: i32) -> (i32, i32, i32) {
    %c0_i32 = arith.constant 0 : i32
    %c0_i32_0 = arith.constant 0 : i32
    %c0_i32_1 = arith.constant 0 : i32
    %c0_i32_2 = arith.constant 0 : i32
    return %c0_i32, %c0_i32_0, %c0_i32_1 : i32, i32, i32
  }
  func.func @transform_3(%arg0: i32, %arg1: i32) -> (i32, i32) {
    %c0_i32 = arith.constant 0 : i32
    %c0_i32_0 = arith.constant 0 : i32
    %c0_i32_1 = arith.constant 0 : i32
    return %c0_i32, %c0_i32_0 : i32, i32
  }
  func.func @transform_4(%arg0: i32, %arg1: i32) -> (i32, i32) {
    %c0_i32 = arith.constant 0 : i32
    %c0_i32_0 = arith.constant 0 : i32
    %c0_i32_1 = arith.constant 0 : i32
    return %c0_i32, %c0_i32_0 : i32, i32
  }
  func.func @transform_5(%arg0: i32, %arg1: i32) -> (i32, i32, i32, i32) {
    %c0_i32 = arith.constant 0 : i32
    %c0_i32_0 = arith.constant 0 : i32
    %c0_i32_1 = arith.constant 0 : i32
    return %arg0, %arg1, %c0_i32, %c0_i32_0 : i32, i32, i32, i32
  }
}

</mosaic_0001>

<llo_original>
// kernel: forward.3
$region0: #{forward.3}
  #allocation0 [shape = 'u32[]', space=smem, size = 0x4, offset = 0x4, fixed_abs, tag = 'smem constant byte address 0x4 - core index']
  #allocation1 [shape = 'u32[144,128]{1,0:T(1,128)}', space=vmem, size = 0x12000, scoped, tag = 'internal scratch']
  %s0 = inlined_call_operand.vmem [shape: f32[2,4,9,9,128], index: 0, kind: input, shape index: {}]
  %s1 = inlined_call_operand.vmem [shape: f32[3,3,128], index: 1, kind: input, shape index: {}]
  %s2 = inlined_call_operand.vmem [shape: f32[1,1,128], index: 2, kind: input, shape index: {}]
  %s3 = inlined_call_operand.vmem [shape: bf16[128,128], index: 3, kind: input, shape index: {}]
  %s4 = inlined_call_operand.vmem [shape: f32[1,128], index: 4, kind: input, shape index: {}]
  %s5 = inlined_call_operand.vmem [shape: f32[2,8,8,128], index: 5, kind: output, shape index: {}]
  %s6 = sld [smem:[#allocation0]]
  $region53: #{forward.3} parent=0
    _
  %s8 = ssub.s32 1, %s6
  %s9 = scalar_select 0, %s8, %s6
  loop: start=0, step=1, limit=4
  $region2: #{forward.3} parent=0 // loop_pre_header
    _
  $region3: #{forward.3} parent=0 // loop_header
    %s11 = sphi 0, %s15
    %p12 = scmp.ge.s32.totalorder %s11, 4
    %s18 = sphi 0, %s30
    %s19 = sphi 0, %s26
    %s20 = sphi 0, %s18
    %s21 = sphi 0, %s19
    %s22 = sphi 0, %s20
    %s23 = sphi 0, %s21
    %s33 = sphi 0, %s35
    %s36 = sphi 0, %s33
    %s37 = sphi 0, %s36
    %s53 = sphi 0, %s37
    %s57 = sphi 0, %s57
    %s59 = sphi 0, %s57
    %s60 = sphi 0, %s59
    %s74 = sphi 0, %s60
    %s78 = sphi 0, %s78
    %s80 = sphi 0, %s78
    %s81 = sphi 0, %s80
    %s95 = sphi 0, %s81
    %s99 = sphi 0, %s99
    %s101 = sphi 0, %s99
    %s102 = sphi 0, %s101
    %s116 = sphi 0, %s102
    %s120 = sphi 0, %s120
    %s122 = sphi 0, %s120
    %s123 = sphi 0, %s122
    %s137 = sphi 0, %s123
    %s145 = sphi 0, %s147
    %s148 = sphi 0, %s145
    %s149 = sphi 0, %s148
    %s165 = sphi 0, %s149
  $region4: #{forward.3} parent=0 // loop_header_branch
    %14 = sbr.rel (%p12) target = $region8
  $region5: #{forward.3} parent=0 // loop_body
    %s16 = ssub.s32 %s11, 1
    %s17 = ssub.s32 %s11, 2
    %s24 = sadd.s32 1, %s19
    %p25 = scmp.ge.s32.totalorder %s24, 1
    %s26 = scalar_select %p25, 0, %s24
    %s27 = sadd.s32 1, %s18
    %s28 = scalar_select %p25, %s27, %s18
    %p29 = scmp.ge.s32.totalorder %s28, 2
    %s30 = scalar_select %p29, 0, %s28
    %s31 = ssub.s32 %s18, %s30
    %p32 = scmp.eq.s32.totalorder %s31, 0
    %s34 = sadd.s32 %s33, 1
    %s35 = scalar_select %p32, %s33, %s34
    %p38 = pneg %p32
    %p39 = scmp.eq.s32.totalorder %s11, 1
    %p40 = por %p38, %p39
    %p41 = scmp.ne.s32.totalorder %s33, %s36
    %p42 = scmp.eq.s32.totalorder %s11, 0
    %p43 = por %p41, %p42
    %p44 = scmp.ne.s32.totalorder %s33, %s36
    %p45 = scmp.eq.s32.totalorder %s16, 1
    %p46 = por %p44, %p45
    %p47 = scmp.ne.s32.totalorder %s36, %s37
    %p48 = scmp.eq.s32.totalorder %s16, 0
    %p49 = por %p47, %p48
    %p50 = scmp.ne.s32.totalorder %s36, %s37
    %p51 = scmp.eq.s32.totalorder %s17, 1
    %p52 = por %p50, %p51
    %p54 = scmp.ne.s32.totalorder %s37, %s53
    %p55 = scmp.eq.s32.totalorder %s17, 0
    %p56 = por %p54, %p55
    %s58 = sadd.s32 %s57, 1
    %p61 = scmp.eq.s32.totalorder %s11, 1
    %p62 = scmp.ne.s32.totalorder %s57, %s59
    %p63 = scmp.eq.s32.totalorder %s11, 0
    %p64 = por %p62, %p63
    %p65 = scmp.ne.s32.totalorder %s57, %s59
    %p66 = scmp.eq.s32.totalorder %s16, 1
    %p67 = por %p65, %p66
    %p68 = scmp.ne.s32.totalorder %s59, %s60
    %p69 = scmp.eq.s32.totalorder %s16, 0
    %p70 = por %p68, %p69
    %p71 = scmp.ne.s32.totalorder %s59, %s60
    %p72 = scmp.eq.s32.totalorder %s17, 1
    %p73 = por %p71, %p72
    %p75 = scmp.ne.s32.totalorder %s60, %s74
    %p76 = scmp.eq.s32.totalorder %s17, 0
    %p77 = por %p75, %p76
    %s79 = sadd.s32 %s78, 1
    %p82 = scmp.eq.s32.totalorder %s11, 1
    %p83 = scmp.ne.s32.totalorder %s78, %s80
    %p84 = scmp.eq.s32.totalorder %s11, 0
    %p85 = por %p83, %p84
    %p86 = scmp.ne.s32.totalorder %s78, %s80
    %p87 = scmp.eq.s32.totalorder %s16, 1
    %p88 = por %p86, %p87
    %p89 = scmp.ne.s32.totalorder %s80, %s81
    %p90 = scmp.eq.s32.totalorder %s16, 0
    %p91 = por %p89, %p90
    %p92 = scmp.ne.s32.totalorder %s80, %s81
    %p93 = scmp.eq.s32.totalorder %s17, 1
    %p94 = por %p92, %p93
    %p96 = scmp.ne.s32.totalorder %s81, %s95
    %p97 = scmp.eq.s32.totalorder %s17, 0
    %p98 = por %p96, %p97
    %s100 = sadd.s32 %s99, 1
    %p103 = scmp.eq.s32.totalorder %s11, 1
    %p104 = scmp.ne.s32.totalorder %s99, %s101
    %p105 = scmp.eq.s32.totalorder %s11, 0
    %p106 = por %p104, %p105
    %p107 = scmp.ne.s32.totalorder %s99, %s101
    %p108 = scmp.eq.s32.totalorder %s16, 1
    %p109 = por %p107, %p108
    %p110 = scmp.ne.s32.totalorder %s101, %s102
    %p111 = scmp.eq.s32.totalorder %s16, 0
    %p112 = por %p110, %p111
    %p113 = scmp.ne.s32.totalorder %s101, %s102
    %p114 = scmp.eq.s32.totalorder %s17, 1
    %p115 = por %p113, %p114
    %p117 = scmp.ne.s32.totalorder %s102, %s116
    %p118 = scmp.eq.s32.totalorder %s17, 0
    %p119 = por %p117, %p118
    %s121 = sadd.s32 %s120, 1
    %p124 = scmp.eq.s32.totalorder %s11, 1
    %p125 = scmp.ne.s32.totalorder %s120, %s122
    %p126 = scmp.eq.s32.totalorder %s11, 0
    %p127 = por %p125, %p126
    %p128 = scmp.ne.s32.totalorder %s120, %s122
    %p129 = scmp.eq.s32.totalorder %s16, 1
    %p130 = por %p128, %p129
    %p131 = scmp.ne.s32.totalorder %s122, %s123
    %p132 = scmp.eq.s32.totalorder %s16, 0
    %p133 = por %p131, %p132
    %p134 = scmp.ne.s32.totalorder %s122, %s123
    %p135 = scmp.eq.s32.totalorder %s17, 1
    %p136 = por %p134, %p135
    %p138 = scmp.ne.s32.totalorder %s123, %s137
    %p139 = scmp.eq.s32.totalorder %s17, 0
    %p140 = por %p138, %p139
    %s141 = ssub.s32 %s18, %s30
    %s142 = ssub.s32 %s19, %s26
    %s143 = sor.u32 %s141, %s142
    %p144 = scmp.eq.s32.totalorder %s143, 0
    %s146 = sadd.s32 %s145, 1
    %s147 = scalar_select %p144, %s145, %s146
    %p150 = pneg %p144
    %p151 = scmp.eq.s32.totalorder %s11, 1
    %p152 = por %p150, %p151
    %p153 = scmp.ne.s32.totalorder %s145, %s148
    %p154 = scmp.eq.s32.totalorder %s11, 0
    %p155 = por %p153, %p154
    %p156 = scmp.ne.s32.totalorder %s145, %s148
    %p157 = scmp.eq.s32.totalorder %s16, 1
    %p158 = por %p156, %p157
    %p159 = scmp.ne.s32.totalorder %s148, %s149
    %p160 = scmp.eq.s32.totalorder %s16, 0
    %p161 = por %p159, %p160
    %p162 = scmp.ne.s32.totalorder %s148, %s149
    %p163 = scmp.eq.s32.totalorder %s17, 1
    %p164 = por %p162, %p163
    %p166 = scmp.ne.s32.totalorder %s149, %s165
    %p167 = scmp.eq.s32.totalorder %s17, 0
    %p168 = por %p166, %p167
    %p169 = scmp.le.s32.totalorder 1, %s11
    %p170 = scmp.lt.s32.totalorder %s11, 3
    %p171 = pnand %p169, %p170
    %p172 = pneg %p171
    // Predicated region
    $region9: #{forward.3} parent=5 // pred_check
      _
    $region10: #{forward.3} parent=5 // pred_check_branch
      %174 = sbr.rel (%p171) target = $region12
    $region11: #{forward.3} parent=5 // pred_region
      %s175 = ssub.s32 %s11, 1
      // Predicated region
      $region13: #{forward.3} parent=11 // pred_check
        %p176 = pneg %p70
      $region14: #{forward.3} parent=11 // pred_check_branch
        %178 = sbr.rel (%p176) target = $region16
      $region15: #{forward.3} parent=11 // pred_region
        _
      $region16: #{forward.3} parent=11 // pred_fallthru
        _
      // Predicated region
      $region17: #{forward.3} parent=11 // pred_check
        %p179 = pneg %p91
      $region18: #{forward.3} parent=11 // pred_check_branch
        %181 = sbr.rel (%p179) target = $region20
      $region19: #{forward.3} parent=11 // pred_region
        _
      $region20: #{forward.3} parent=11 // pred_fallthru
        _
      // Predicated region
      $region21: #{forward.3} parent=11 // pred_check
        %p182 = pneg %p112
      $region22: #{forward.3} parent=11 // pred_check_branch
        %184 = sbr.rel (%p182) target = $region24
      $region23: #{forward.3} parent=11 // pred_region
        _
      $region24: #{forward.3} parent=11 // pred_fallthru
        _
      // Predicated region
      $region25: #{forward.3} parent=11 // pred_check
        %p185 = pneg %p133
      $region26: #{forward.3} parent=11 // pred_check_branch
        %187 = sbr.rel (%p185) target = $region28
      $region27: #{forward.3} parent=11 // pred_region
        _
      $region28: #{forward.3} parent=11 // pred_fallthru
        _
    $region12: #{forward.3} parent=5 // pred_fallthru
      _
    %p188 = scmp.lt.s32.totalorder %s11, 2
    // Predicated region
    $region29: #{forward.3} parent=5 // pred_check
      %p189 = pneg %p188
    $region30: #{forward.3} parent=5 // pred_check_branch
      %191 = sbr.rel (%p189) target = $region32
    $region31: #{forward.3} parent=5 // pred_region
      // Predicated region
      $region33: #{forward.3} parent=31 // pred_check
        %p192 = pneg %p43
      $region34: #{forward.3} parent=31 // pred_check_branch
        %194 = sbr.rel (%p192) target = $region36
      $region35: #{forward.3} parent=31 // pred_region
        %p195 = scmp.lt.s32.totalorder %s18, 1
        %s196 = scalar_select %p195, %s18, 1
        %s197 = smul.addr %s196, 72
        %s198 = smul.addr %s197, 8
        %s199 = scalar_lea.vmem %s0, %s198
      $region36: #{forward.3} parent=31 // pred_fallthru
        _
    $region32: #{forward.3} parent=5 // pred_fallthru
      _
    %p200 = scmp.le.s32.totalorder 1, %s11
    %p201 = scmp.lt.s32.totalorder %s11, 3
    %p202 = pnand %p200, %p201
    %p203 = pneg %p202
    // Predicated region
    $region37: #{forward.3} parent=5 // pred_check
      _
    $region38: #{forward.3} parent=5 // pred_check_branch
      %205 = sbr.rel (%p202) target = $region40
    $region39: #{forward.3} parent=5 // pred_region
      %s206 = ssub.s32 %s11, 1
      %p207 = scmp.lt.s32.totalorder %s20, 1
      %s208 = scalar_select %p207, %s20, 1
      %s209 = smul.addr %s208, 72
      %s210 = smul.addr %s209, 8
      %s211 = scalar_lea.vmem %s0, %s210
      %p212 = pneg %p49
      %p213 = pneg %p46
      %p214 = pneg %p70
      %p215 = pneg %p67
      %p216 = pneg %p91
      %p217 = pneg %p88
      %p218 = pneg %p112
      %p219 = pneg %p109
      %p220 = pneg %p133
      %p221 = pneg %p130
      %p222 = pneg %p161
      %p223 = pneg %p158
      %s224 = smul.u32 8, %s21
      %p225 = scmp.lt.s32.totalorder %s20, 1
      %s226 = scalar_select %p225, %s20, 1
      %p227 = scmp.lt.s32.totalorder %s224, 7
      %s228 = scalar_select %p227, %s224, 7
      %s229 = smul.addr %s226, 8
      %s230 = sadd.s32 %s228, %s229
      %s231 = smul.addr %s230, 8
      %s232 = scalar_lea.vmem %s5, %s231
      %p233 = scmp.lt.s32.totalorder %s20, 1
      %s234 = scalar_select %p233, %s20, 1
      %s235 = smul.addr %s234, 72
      %s236 = smul.addr %s235, 8
      %s237 = scalar_lea.vmem %s0, %s236
      %s238 = smul.u32 8, %s21
      %p239 = scmp.lt.s32.totalorder %s20, 1
      %s240 = scalar_select %p239, %s20, 1
      %p241 = scmp.lt.s32.totalorder %s238, 7
      %s242 = scalar_select %p241, %s238, 7
      %s243 = smul.addr %s240, 8
      %s244 = sadd.s32 %s242, %s243
      %s245 = smul.addr %s244, 8
      %s246 = scalar_lea.vmem %s5, %s245
      %s247 = smul.u32 8, %s21
      %s249 = smul.u32 %s21, 8
      %v250 = vld [vmem:[%s1] sm:$0x7]
      %v251 = vld [vmem:[%s1 + $0x4] sm:$0x7]
      %v252 = vld [vmem:[%s1 + $0x8] sm:$0x7]
      %s253 = smul.u32 %s249, 16
      %s254 = scalar_lea.vmem %s237, %s253
      %v255 = vld [vmem:[%s254] sm:$0xff]
      %v256 = vld [vmem:[%s254 + $0x10] sm:$0xff]
      %v257 = vld [vmem:[%s254 + $0x20] sm:$0xff]
      %v258 = vld [vmem:[%s254 + $0x30] sm:$0xff]
      %v259 = vld [vmem:[%s254 + $0x40] sm:$0xff]
      %v260 = vld [vmem:[%s254 + $0x50] sm:$0xff]
      %v261 = vld [vmem:[%s254 + $0x60] sm:$0xff]
      %v262 = vld [vmem:[%s254 + $0x70] sm:$0xff]
      %v263 = vlaneseq
      %v264 = vshrl.u32 %v263, 7
      %v265 = vsub.s32 0, %v264
      %v266 = vrot.slane %v250, %v265
      %v267 = vmul.f32 %v255, %v266
      %v268 = vmul.f32 %v256, %v266
      %v269 = vmul.f32 %v257, %v266
      %v270 = vmul.f32 %v258, %v266
      %v271 = vmul.f32 %v259, %v266
      %v272 = vmul.f32 %v260, %v266
      %v273 = vmul.f32 %v261, %v266
      %v274 = vmul.f32 %v262, %v266
      %v275 = vadd.f32 %v267, 0.0
      %v276 = vadd.f32 %v268, 0.0
      %v277 = vadd.f32 %v269, 0.0
      %v278 = vadd.f32 %v270, 0.0
      %v279 = vadd.f32 %v271, 0.0
      %v280 = vadd.f32 %v272, 0.0
      %v281 = vadd.f32 %v273, 0.0
      %v282 = vadd.f32 %v274, 0.0
      %s283 = sadd.s32 %s253, 144
      %s284 = scalar_lea.vmem %s237, %s283
      %v285 = vld [vmem:[%s284] sm:$0xff]
      %v286 = vld [vmem:[%s284 + $0x10] sm:$0xff]
      %v287 = vld [vmem:[%s284 + $0x20] sm:$0xff]
      %v288 = vld [vmem:[%s284 + $0x30] sm:$0xff]
      %v289 = vld [vmem:[%s284 + $0x40] sm:$0xff]
      %v290 = vld [vmem:[%s284 + $0x50] sm:$0xff]
      %v291 = vld [vmem:[%s284 + $0x60] sm:$0xff]
      %v292 = vld [vmem:[%s284 + $0x70] sm:$0xff]
      %v293 = vlaneseq
      %v294 = vshrl.u32 %v293, 7
      %v295 = vsub.s32 1, %v294
      %v296 = vrot.slane %v250, %v295
      %v297 = vmul.f32 %v285, %v296
      %v298 = vmul.f32 %v286, %v296
      %v299 = vmul.f32 %v287, %v296
      %v300 = vmul.f32 %v288, %v296
      %v301 = vmul.f32 %v289, %v296
      %v302 = vmul.f32 %v290, %v296
      %v303 = vmul.f32 %v291, %v296
      %v304 = vmul.f32 %v292, %v296
      %v305 = vadd.f32 %v275, %v297
      %v306 = vadd.f32 %v276, %v298
      %v307 = vadd.f32 %v277, %v299
      %v308 = vadd.f32 %v278, %v300
      %v309 = vadd.f32 %v279, %v301
      %v310 = vadd.f32 %v280, %v302
      %v311 = vadd.f32 %v281, %v303
      %v312 = vadd.f32 %v282, %v304
      %v313 = vld [vmem:[%s254 + $0x1] sm:$0xff]
      %v314 = vld [vmem:[%s254 + $0x11] sm:$0xff]
      %v315 = vld [vmem:[%s254 + $0x21] sm:$0xff]
      %v316 = vld [vmem:[%s254 + $0x31] sm:$0xff]
      %v317 = vld [vmem:[%s254 + $0x41] sm:$0xff]
      %v318 = vld [vmem:[%s254 + $0x51] sm:$0xff]
      %v319 = vld [vmem:[%s254 + $0x61] sm:$0xff]
      %v320 = vld [vmem:[%s254 + $0x71] sm:$0xff]
      %v321 = vlaneseq
      %v322 = vshrl.u32 %v321, 7
      %v323 = vsub.s32 2, %v322
      %v324 = vrot.slane %v250, %v323
      %v325 = vmul.f32 %v313, %v324
      %v326 = vmul.f32 %v314, %v324
      %v327 = vmul.f32 %v315, %v324
      %v328 = vmul.f32 %v316, %v324
      %v329 = vmul.f32 %v317, %v324
      %v330 = vmul.f32 %v318, %v324
      %v331 = vmul.f32 %v319, %v324
      %v332 = vmul.f32 %v320, %v324
      %v333 = vadd.f32 %v305, %v325
      %v334 = vadd.f32 %v306, %v326
      %v335 = vadd.f32 %v307, %v327
      %v336 = vadd.f32 %v308, %v328
      %v337 = vadd.f32 %v309, %v329
      %v338 = vadd.f32 %v310, %v330
      %v339 = vadd.f32 %v311, %v331
      %v340 = vadd.f32 %v312, %v332
      %s341 = sadd.s32 %s253, 288
      %s342 = scalar_lea.vmem %s237, %s341
      %v343 = vld [vmem:[%s342] sm:$0xff]
      %v344 = vld [vmem:[%s342 + $0x10] sm:$0xff]
      %v345 = vld [vmem:[%s342 + $0x20] sm:$0xff]
      %v346 = vld [vmem:[%s342 + $0x30] sm:$0xff]
      %v347 = vld [vmem:[%s342 + $0x40] sm:$0xff]
      %v348 = vld [vmem:[%s342 + $0x50] sm:$0xff]
      %v349 = vld [vmem:[%s342 + $0x60] sm:$0xff]
      %v350 = vld [vmem:[%s342 + $0x70] sm:$0xff]
      %v351 = vlaneseq
      %v352 = vshrl.u32 %v351, 7
      %v353 = vsub.s32 0, %v352
      %v354 = vrot.slane %v251, %v353
      %v355 = vmul.f32 %v343, %v354
      %v356 = vmul.f32 %v344, %v354
      %v357 = vmul.f32 %v345, %v354
      %v358 = vmul.f32 %v346, %v354
      %v359 = vmul.f32 %v347, %v354
      %v360 = vmul.f32 %v348, %v354
      %v361 = vmul.f32 %v349, %v354
      %v362 = vmul.f32 %v350, %v354
      %v363 = vadd.f32 %v333, %v355
      %v364 = vadd.f32 %v334, %v356
      %v365 = vadd.f32 %v335, %v357
      %v366 = vadd.f32 %v336, %v358
      %v367 = vadd.f32 %v337, %v359
      %v368 = vadd.f32 %v338, %v360
      %v369 = vadd.f32 %v339, %v361
      %v370 = vadd.f32 %v340, %v362
      %s371 = sadd.s32 %s253, 432
      %s372 = scalar_lea.vmem %s237, %s371
      %v373 = vld [vmem:[%s372] sm:$0xff]
      %v374 = vld [vmem:[%s372 + $0x10] sm:$0xff]
      %v375 = vld [vmem:[%s372 + $0x20] sm:$0xff]
      %v376 = vld [vmem:[%s372 + $0x30] sm:$0xff]
      %v377 = vld [vmem:[%s372 + $0x40] sm:$0xff]
      %v378 = vld [vmem:[%s372 + $0x50] sm:$0xff]
      %v379 = vld [vmem:[%s372 + $0x60] sm:$0xff]
      %v380 = vld [vmem:[%s372 + $0x70] sm:$0xff]
      %v381 = vlaneseq
      %v382 = vshrl.u32 %v381, 7
      %v383 = vsub.s32 1, %v382
      %v384 = vrot.slane %v251, %v383
      %v385 = vmul.f32 %v373, %v384
      %v386 = vmul.f32 %v374, %v384
      %v387 = vmul.f32 %v375, %v384
      %v388 = vmul.f32 %v376, %v384
      %v389 = vmul.f32 %v377, %v384
      %v390 = vmul.f32 %v378, %v384
      %v391 = vmul.f32 %v379, %v384
      %v392 = vmul.f32 %v380, %v384
      %v393 = vadd.f32 %v363, %v385
      %v394 = vadd.f32 %v364, %v386
      %v395 = vadd.f32 %v365, %v387
      %v396 = vadd.f32 %v366, %v388
      %v397 = vadd.f32 %v367, %v389
      %v398 = vadd.f32 %v368, %v390
      %v399 = vadd.f32 %v369, %v391
      %v400 = vadd.f32 %v370, %v392
      %v401 = vld [vmem:[%s342 + $0x1] sm:$0xff]
      %v402 = vld [vmem:[%s342 + $0x11] sm:$0xff]
      %v403 = vld [vmem:[%s342 + $0x21] sm:$0xff]
      %v404 = vld [vmem:[%s342 + $0x31] sm:$0xff]
      %v405 = vld [vmem:[%s342 + $0x41] sm:$0xff]
      %v406 = vld [vmem:[%s342 + $0x51] sm:$0xff]
      %v407 = vld [vmem:[%s342 + $0x61] sm:$0xff]
      %v408 = vld [vmem:[%s342 + $0x71] sm:$0xff]
      %v409 = vlaneseq
      %v410 = vshrl.u32 %v409, 7
      %v411 = vsub.s32 2, %v410
      %v412 = vrot.slane %v251, %v411
      %v413 = vmul.f32 %v401, %v412
      %v414 = vmul.f32 %v402, %v412
      %v415 = vmul.f32 %v403, %v412
      %v416 = vmul.f32 %v404, %v412
      %v417 = vmul.f32 %v405, %v412
      %v418 = vmul.f32 %v406, %v412
      %v419 = vmul.f32 %v407, %v412
      %v420 = vmul.f32 %v408, %v412
      %v421 = vadd.f32 %v393, %v413
      %v422 = vadd.f32 %v394, %v414
      %v423 = vadd.f32 %v395, %v415
      %v424 = vadd.f32 %v396, %v416
      %v425 = vadd.f32 %v397, %v417
      %v426 = vadd.f32 %v398, %v418
      %v427 = vadd.f32 %v399, %v419
      %v428 = vadd.f32 %v400, %v420
      %s429 = sadd.s32 %s249, 1
      %s430 = smul.u32 %s429, 16
      %s431 = scalar_lea.vmem %s237, %s430
      %v432 = vld [vmem:[%s431] sm:$0xff]
      %v433 = vld [vmem:[%s431 + $0x10] sm:$0xff]
      %v434 = vld [vmem:[%s431 + $0x20] sm:$0xff]
      %v435 = vld [vmem:[%s431 + $0x30] sm:$0xff]
      %v436 = vld [vmem:[%s431 + $0x40] sm:$0xff]
      %v437 = vld [vmem:[%s431 + $0x50] sm:$0xff]
      %v438 = vld [vmem:[%s431 + $0x60] sm:$0xff]
      %v439 = vld [vmem:[%s431 + $0x70] sm:$0xff]
      %v440 = vlaneseq
      %v441 = vshrl.u32 %v440, 7
      %v442 = vsub.s32 0, %v441
      %v443 = vrot.slane %v252, %v442
      %v444 = vmul.f32 %v432, %v443
      %v445 = vmul.f32 %v433, %v443
      %v446 = vmul.f32 %v434, %v443
      %v447 = vmul.f32 %v435, %v443
      %v448 = vmul.f32 %v436, %v443
      %v449 = vmul.f32 %v437, %v443
      %v450 = vmul.f32 %v438, %v443
      %v451 = vmul.f32 %v439, %v443
      %v452 = vadd.f32 %v421, %v444
      %v453 = vadd.f32 %v422, %v445
      %v454 = vadd.f32 %v423, %v446
      %v455 = vadd.f32 %v424, %v447
      %v456 = vadd.f32 %v425, %v448
      %v457 = vadd.f32 %v426, %v449
      %v458 = vadd.f32 %v427, %v450
      %v459 = vadd.f32 %v428, %v451
      %s460 = sadd.s32 %s430, 144
      %s461 = scalar_lea.vmem %s237, %s460
      %v462 = vld [vmem:[%s461] sm:$0xff]
      %v463 = vld [vmem:[%s461 + $0x10] sm:$0xff]
      %v464 = vld [vmem:[%s461 + $0x20] sm:$0xff]
      %v465 = vld [vmem:[%s461 + $0x30] sm:$0xff]
      %v466 = vld [vmem:[%s461 + $0x40] sm:$0xff]
      %v467 = vld [vmem:[%s461 + $0x50] sm:$0xff]
      %v468 = vld [vmem:[%s461 + $0x60] sm:$0xff]
      %v469 = vld [vmem:[%s461 + $0x70] sm:$0xff]
      %v470 = vlaneseq
      %v471 = vshrl.u32 %v470, 7
      %v472 = vsub.s32 1, %v471
      %v473 = vrot.slane %v252, %v472
      %v474 = vmul.f32 %v462, %v473
      %v475 = vmul.f32 %v463, %v473
      %v476 = vmul.f32 %v464, %v473
      %v477 = vmul.f32 %v465, %v473
      %v478 = vmul.f32 %v466, %v473
      %v479 = vmul.f32 %v467, %v473
      %v480 = vmul.f32 %v468, %v473
      %v481 = vmul.f32 %v469, %v473
      %v482 = vadd.f32 %v452, %v474
      %v483 = vadd.f32 %v453, %v475
      %v484 = vadd.f32 %v454, %v476
      %v485 = vadd.f32 %v455, %v477
      %v486 = vadd.f32 %v456, %v478
      %v487 = vadd.f32 %v457, %v479
      %v488 = vadd.f32 %v458, %v480
      %v489 = vadd.f32 %v459, %v481
      %v490 = vld [vmem:[%s431 + $0x1] sm:$0xff]
      %v491 = vld [vmem:[%s431 + $0x11] sm:$0xff]
      %v492 = vld [vmem:[%s431 + $0x21] sm:$0xff]
      %v493 = vld [vmem:[%s431 + $0x31] sm:$0xff]
      %v494 = vld [vmem:[%s431 + $0x41] sm:$0xff]
      %v495 = vld [vmem:[%s431 + $0x51] sm:$0xff]
      %v496 = vld [vmem:[%s431 + $0x61] sm:$0xff]
      %v497 = vld [vmem:[%s431 + $0x71] sm:$0xff]
      %v498 = vlaneseq
      %v499 = vshrl.u32 %v498, 7
      %v500 = vsub.s32 2, %v499
      %v501 = vrot.slane %v252, %v500
      %v502 = vmul.f32 %v490, %v501
      %v503 = vmul.f32 %v491, %v501
      %v504 = vmul.f32 %v492, %v501
      %v505 = vmul.f32 %v493, %v501
      %v506 = vmul.f32 %v494, %v501
      %v507 = vmul.f32 %v495, %v501
      %v508 = vmul.f32 %v496, %v501
      %v509 = vmul.f32 %v497, %v501
      %v510 = vadd.f32 %v482, %v502
      %v511 = vadd.f32 %v483, %v503
      %v512 = vadd.f32 %v484, %v504
      %v513 = vadd.f32 %v485, %v505
      %v514 = vadd.f32 %v486, %v506
      %v515 = vadd.f32 %v487, %v507
      %v516 = vadd.f32 %v488, %v508
      %v517 = vadd.f32 %v489, %v509
      %v518 = vld [vmem:[%s2] sm:$0x1]
      %v520 = vlaneseq
      %v521 = vshrl.u32 %v520, 7
      %v522 = vsub.s32 0, %v521
      %v523 = vrot.slane %v518, %v522
      %v525 = vadd.f32 %v510, %v523
      %v526 = vadd.f32 %v511, %v523
      %v527 = vadd.f32 %v512, %v523
      %v528 = vadd.f32 %v513, %v523
      %v529 = vadd.f32 %v514, %v523
      %v530 = vadd.f32 %v515, %v523
      %v531 = vadd.f32 %v516, %v523
      %v532 = vadd.f32 %v517, %v523
      %v533 = vmax.f32 %v525, 0.0
      %v534 = vmax.f32 %v526, 0.0
      %v535 = vmax.f32 %v527, 0.0
      %v536 = vmax.f32 %v528, 0.0
      %v537 = vmax.f32 %v529, 0.0
      %v538 = vmax.f32 %v530, 0.0
      %v539 = vmax.f32 %v531, 0.0
      %v540 = vmax.f32 %v532, 0.0
      %v541 = vpack.c.bf16 %v534, %v533
      %v542 = vpack.c.bf16 %v536, %v535
      %v543 = vpack.c.bf16 %v538, %v537
      %v544 = vpack.c.bf16 %v540, %v539
      %v545 = vld [vmem:[%s3] sm:$0xf]
      %v546 = vld [vmem:[%s3 + $0x4] sm:$0xf]
      %v547 = vld [vmem:[%s3 + $0x8] sm:$0xf]
      %v548 = vld [vmem:[%s3 + $0xc] sm:$0xf]
      %v549 = vld [vmem:[%s3 + $0x10] sm:$0xf]
      %v550 = vld [vmem:[%s3 + $0x14] sm:$0xf]
      %v551 = vld [vmem:[%s3 + $0x18] sm:$0xf]
      %v552 = vld [vmem:[%s3 + $0x1c] sm:$0xf]
      %v553 = vld [vmem:[%s3 + $0x20] sm:$0xf]
      %v554 = vld [vmem:[%s3 + $0x24] sm:$0xf]
      %v555 = vld [vmem:[%s3 + $0x28] sm:$0xf]
      %v556 = vld [vmem:[%s3 + $0x2c] sm:$0xf]
      %v557 = vld [vmem:[%s3 + $0x30] sm:$0xf]
      %v558 = vld [vmem:[%s3 + $0x34] sm:$0xf]
      %v559 = vld [vmem:[%s3 + $0x38] sm:$0xf]
      %v560 = vld [vmem:[%s3 + $0x3c] sm:$0xf]
      %v561 = vld [vmem:[%s4] sm:$0x1]
      %v563 = vlaneseq
      %v564 = vshrl.u32 %v563, 7
      %v565 = vsub.s32 0, %v564
      %v566 = vrot.slane %v561, %v565
      %v584 = vunpack.c.l.b16 %v545
      %v585 = vunpack.c.l.b16 %v546
      %v586 = vunpack.c.l.b16 %v547
      %v587 = vunpack.c.l.b16 %v548
      %v588 = vunpack.c.l.b16 %v549
      %v589 = vunpack.c.l.b16 %v550
      %v590 = vunpack.c.l.b16 %v551
      %v591 = vunpack.c.l.b16 %v552
      %v592 = vunpack.c.l.b16 %v553
      %v593 = vunpack.c.l.b16 %v554
      %v594 = vunpack.c.l.b16 %v555
      %v595 = vunpack.c.l.b16 %v556
      %v596 = vunpack.c.l.b16 %v557
      %v597 = vunpack.c.l.b16 %v558
      %v598 = vunpack.c.l.b16 %v559
      %v599 = vunpack.c.l.b16 %v560
      %v600 = vpack.c.b16 %v585, %v584
      %v601 = vpack.c.b16 %v587, %v586
      %v602 = vpack.c.b16 %v589, %v588
      %v603 = vpack.c.b16 %v591, %v590
      %v604 = vpack.c.b16 %v593, %v592
      %v605 = vpack.c.b16 %v595, %v594
      %v606 = vpack.c.b16 %v597, %v596
      %v607 = vpack.c.b16 %v599, %v598
      %616 = vmatprep.subr.bf16.mxu0 0
      %617 = vmatpush1.bf16.msra.mxu0 %v607
      %618 = vmatprep.subr.bf16.mxu0 0
      %619 = vmatpush1.bf16.msra.mxu0 %v606
      %620 = vmatprep.subr.bf16.mxu0 0
      %621 = vmatpush1.bf16.msra.mxu0 %v605
      %622 = vmatprep.subr.bf16.mxu0 0
      %623 = vmatpush1.bf16.msra.mxu0 %v604
      %624 = vmatprep.subr.bf16.mxu0 0
      %625 = vmatpush1.bf16.msra.mxu0 %v603
      %626 = vmatprep.subr.bf16.mxu0 0
      %627 = vmatpush1.bf16.msra.mxu0 %v602
      %628 = vmatprep.subr.bf16.mxu0 0
      %629 = vmatpush1.bf16.msra.mxu0 %v601
      %630 = vmatprep.subr.bf16.mxu0 0
      %631 = vmatpush1.bf16.msra.mxu0 %v600
      %632 = vmatprep.subr.bf16.mxu0 0
      %633 = vmatpush2.bf16.msra.mxu0 0
      %634 = vmatprep.subr.bf16.mxu0 0
      %635 = vmatpush2.bf16.msra.mxu0 0
      %636 = vmatprep.subr.bf16.mxu0 0
      %637 = vmatpush2.bf16.msra.mxu0 0
      %638 = vmatprep.subr.bf16.mxu0 0
      %639 = vmatpush2.bf16.msra.mxu0 0
      %640 = vmatprep.subr.bf16.mxu0 0
      %641 = vmatpush2.bf16.msra.mxu0 0
      %642 = vmatprep.subr.bf16.mxu0 0
      %643 = vmatpush2.bf16.msra.mxu0 0
      %644 = vmatprep.subr.bf16.mxu0 0
      %645 = vmatpush2.bf16.msra.mxu0 0
      %646 = vmatprep.subr.bf16.mxu0 0
      %647 = vmatpush2.bf16.msra.mxu0 0
      %648 = vmatprep.mubr.bf16.mxu0 0
      %649 = vmatmul.mubr.bf16.gmra.mxu0 %v541
      %v650 = vpop.f32.mrf.mxu0
      %v651 = vadd.f32 %v566, %v650
      %v652 = vpop.f32.mrf.mxu0
      %v653 = vpop.f32.mrf.mxu0
      %v654 = vadd.f32 %v566, %v653
      %v655 = vpop.f32.mrf.mxu0
      %656 = vmatprep.mubr.bf16.mxu0 0
      %657 = vmatmul.mubr.bf16.gmra.mxu0 %v542
      %v658 = vpop.f32.mrf.mxu0
      %v659 = vadd.f32 %v566, %v658
      %v660 = vpop.f32.mrf.mxu0
      %v661 = vpop.f32.mrf.mxu0
      %v662 = vadd.f32 %v566, %v661
      %v663 = vpop.f32.mrf.mxu0
      %664 = vmatprep.mubr.bf16.mxu0 0
      %665 = vmatmul.mubr.bf16.gmra.mxu0 %v543
      %v666 = vpop.f32.mrf.mxu0
      %v667 = vadd.f32 %v566, %v666
      %v668 = vpop.f32.mrf.mxu0
      %v669 = vpop.f32.mrf.mxu0
      %v670 = vadd.f32 %v566, %v669
      %v671 = vpop.f32.mrf.mxu0
      %672 = vmatprep.mubr.bf16.mxu0 0
      %673 = vmatmul.mubr.bf16.gmra.mxu0 %v544
      %v674 = vpop.f32.mrf.mxu0
      %v675 = vadd.f32 %v566, %v674
      %v676 = vpop.f32.mrf.mxu0
      %v677 = vpop.f32.mrf.mxu0
      %v678 = vadd.f32 %v566, %v677
      %v679 = vpop.f32.mrf.mxu0
      %680 = vdwg.mxu0
      %v681 = vmax.f32 %v651, 0.0
      %v682 = vmax.f32 %v654, 0.0
      %v683 = vmax.f32 %v659, 0.0
      %v684 = vmax.f32 %v662, 0.0
      %v685 = vmax.f32 %v667, 0.0
      %v686 = vmax.f32 %v670, 0.0
      %v687 = vmax.f32 %v675, 0.0
      %v688 = vmax.f32 %v678, 0.0
      %689 = vst [vmem:[%s246] sm:$0xff] %v681
      %690 = vst [vmem:[%s246 + $0x8] sm:$0xff] %v682
      %691 = vst [vmem:[%s246 + $0x10] sm:$0xff] %v683
      %692 = vst [vmem:[%s246 + $0x18] sm:$0xff] %v684
      %693 = vst [vmem:[%s246 + $0x20] sm:$0xff] %v685
      %694 = vst [vmem:[%s246 + $0x28] sm:$0xff] %v686
      %695 = vst [vmem:[%s246 + $0x30] sm:$0xff] %v687
      %696 = vst [vmem:[%s246 + $0x38] sm:$0xff] %v688
      %s697 = smul.u32 8, %s21
      %p698 = scmp.lt.s32.totalorder %s20, 1
      %s699 = scalar_select %p698, %s20, 1
      %p700 = scmp.lt.s32.totalorder %s697, 7
      %s701 = scalar_select %p700, %s697, 7
      %s702 = smul.addr %s699, 8
      %s703 = sadd.s32 %s701, %s702
      %s704 = smul.addr %s703, 8
      %s705 = scalar_lea.vmem %s5, %s704
      // Predicated region
      $region41: #{forward.3} parent=39 // pred_check
        %p706 = pneg %p158
      $region42: #{forward.3} parent=39 // pred_check_branch
        %708 = sbr.rel (%p706) target = $region44
      $region43: #{forward.3} parent=39 // pred_region
        %s709 = smul.u32 8, %s21
      $region44: #{forward.3} parent=39 // pred_fallthru
        _
    $region40: #{forward.3} parent=5 // pred_fallthru
      _
    %p710 = scmp.le.s32.totalorder 2, %s11
    // Predicated region
    $region45: #{forward.3} parent=5 // pred_check
      %p711 = pneg %p710
    $region46: #{forward.3} parent=5 // pred_check_branch
      %713 = sbr.rel (%p711) target = $region48
    $region47: #{forward.3} parent=5 // pred_region
      %s714 = ssub.s32 %s11, 2
      // Predicated region
      $region49: #{forward.3} parent=47 // pred_check
        %p715 = pneg %p164
      $region50: #{forward.3} parent=47 // pred_check_branch
        %717 = sbr.rel (%p715) target = $region52
      $region51: #{forward.3} parent=47 // pred_region
        %s718 = smul.u32 8, %s23
        %p719 = scmp.lt.s32.totalorder %s22, 1
        %s720 = scalar_select %p719, %s22, 1
        %p721 = scmp.lt.s32.totalorder %s718, 7
        %s722 = scalar_select %p721, %s718, 7
        %s723 = smul.addr %s720, 8
        %s724 = sadd.s32 %s722, %s723
        %s725 = smul.addr %s724, 8
        %s726 = scalar_lea.vmem %s5, %s725
      $region52: #{forward.3} parent=47 // pred_fallthru
        _
    $region48: #{forward.3} parent=5 // pred_fallthru
      _
  $region6: #{forward.3} parent=0 // loop_footer
    %s15 = sadd.s32 1, %s11
  $region7: #{forward.3} parent=0 // loop_footer_branch
    %10 = sbr.rel target = $region3
  $region8: #{forward.3} parent=0 // loop_exit
    _

// kernel: forward.2
$region0: #{forward.2}
  #allocation0 [shape = 'u32[]', space=smem, size = 0x4, offset = 0x4, fixed_abs, tag = 'smem constant byte address 0x4 - core index']
  #allocation1 [shape = 'u32[144,128]{1,0:T(1,128)}', space=vmem, size = 0x12000, scoped, tag = 'internal scratch']
  %s0 = inlined_call_operand.vmem [shape: f32[2,1,18,18,16], index: 0, kind: input, shape index: {}]
  %s1 = inlined_call_operand.vmem [shape: f32[3,3,16], index: 1, kind: input, shape index: {}]
  %s2 = inlined_call_operand.vmem [shape: f32[1,1,16], index: 2, kind: input, shape index: {}]
  %s3 = inlined_call_operand.vmem [shape: bf16[16,128], index: 3, kind: input, shape index: {}]
  %s4 = inlined_call_operand.vmem [shape: f32[1,128], index: 4, kind: input, shape index: {}]
  %s5 = inlined_call_operand.vmem [shape: f32[2,16,16,128], index: 5, kind: output, shape index: {}]
  %s6 = sld [smem:[#allocation0]]
  $region53: #{forward.2} parent=0
    _
  %s8 = ssub.s32 1, %s6
  %s9 = scalar_select 0, %s8, %s6
  loop: start=0, step=1, limit=4
  $region2: #{forward.2} parent=0 // loop_pre_header
    _
  $region3: #{forward.2} parent=0 // loop_header
    %s11 = sphi 0, %s15
    %p12 = scmp.ge.s32.totalorder %s11, 4
    %s18 = sphi 0, %s30
    %s19 = sphi 0, %s26
    %s20 = sphi 0, %s18
    %s21 = sphi 0, %s19
    %s22 = sphi 0, %s20
    %s23 = sphi 0, %s21
    %s33 = sphi 0, %s35
    %s36 = sphi 0, %s33
    %s37 = sphi 0, %s36
    %s53 = sphi 0, %s37
    %s57 = sphi 0, %s57
    %s59 = sphi 0, %s57
    %s60 = sphi 0, %s59
    %s74 = sphi 0, %s60
    %s78 = sphi 0, %s78
    %s80 = sphi 0, %s78
    %s81 = sphi 0, %s80
    %s95 = sphi 0, %s81
    %s99 = sphi 0, %s99
    %s101 = sphi 0, %s99
    %s102 = sphi 0, %s101
    %s116 = sphi 0, %s102
    %s120 = sphi 0, %s120
    %s122 = sphi 0, %s120
    %s123 = sphi 0, %s122
    %s137 = sphi 0, %s123
    %s145 = sphi 0, %s147
    %s148 = sphi 0, %s145
    %s149 = sphi 0, %s148
    %s165 = sphi 0, %s149
  $region4: #{forward.2} parent=0 // loop_header_branch
    %14 = sbr.rel (%p12) target = $region8
  $region5: #{forward.2} parent=0 // loop_body
    %s16 = ssub.s32 %s11, 1
    %s17 = ssub.s32 %s11, 2
    %s24 = sadd.s32 1, %s19
    %p25 = scmp.ge.s32.totalorder %s24, 1
    %s26 = scalar_select %p25, 0, %s24
    %s27 = sadd.s32 1, %s18
    %s28 = scalar_select %p25, %s27, %s18
    %p29 = scmp.ge.s32.totalorder %s28, 2
    %s30 = scalar_select %p29, 0, %s28
    %s31 = ssub.s32 %s18, %s30
    %p32 = scmp.eq.s32.totalorder %s31, 0
    %s34 = sadd.s32 %s33, 1
    %s35 = scalar_select %p32, %s33, %s34
    %p38 = pneg %p32
    %p39 = scmp.eq.s32.totalorder %s11, 1
    %p40 = por %p38, %p39
    %p41 = scmp.ne.s32.totalorder %s33, %s36
    %p42 = scmp.eq.s32.totalorder %s11, 0
    %p43 = por %p41, %p42
    %p44 = scmp.ne.s32.totalorder %s33, %s36
    %p45 = scmp.eq.s32.totalorder %s16, 1
    %p46 = por %p44, %p45
    %p47 = scmp.ne.s32.totalorder %s36, %s37
    %p48 = scmp.eq.s32.totalorder %s16, 0
    %p49 = por %p47, %p48
    %p50 = scmp.ne.s32.totalorder %s36, %s37
    %p51 = scmp.eq.s32.totalorder %s17, 1
    %p52 = por %p50, %p51
    %p54 = scmp.ne.s32.totalorder %s37, %s53
    %p55 = scmp.eq.s32.totalorder %s17, 0
    %p56 = por %p54, %p55
    %s58 = sadd.s32 %s57, 1
    %p61 = scmp.eq.s32.totalorder %s11, 1
    %p62 = scmp.ne.s32.totalorder %s57, %s59
    %p63 = scmp.eq.s32.totalorder %s11, 0
    %p64 = por %p62, %p63
    %p65 = scmp.ne.s32.totalorder %s57, %s59
    %p66 = scmp.eq.s32.totalorder %s16, 1
    %p67 = por %p65, %p66
    %p68 = scmp.ne.s32.totalorder %s59, %s60
    %p69 = scmp.eq.s32.totalorder %s16, 0
    %p70 = por %p68, %p69
    %p71 = scmp.ne.s32.totalorder %s59, %s60
    %p72 = scmp.eq.s32.totalorder %s17, 1
    %p73 = por %p71, %p72
    %p75 = scmp.ne.s32.totalorder %s60, %s74
    %p76 = scmp.eq.s32.totalorder %s17, 0
    %p77 = por %p75, %p76
    %s79 = sadd.s32 %s78, 1
    %p82 = scmp.eq.s32.totalorder %s11, 1
    %p83 = scmp.ne.s32.totalorder %s78, %s80
    %p84 = scmp.eq.s32.totalorder %s11, 0
    %p85 = por %p83, %p84
    %p86 = scmp.ne.s32.totalorder %s78, %s80
    %p87 = scmp.eq.s32.totalorder %s16, 1
    %p88 = por %p86, %p87
    %p89 = scmp.ne.s32.totalorder %s80, %s81
    %p90 = scmp.eq.s32.totalorder %s16, 0
    %p91 = por %p89, %p90
    %p92 = scmp.ne.s32.totalorder %s80, %s81
    %p93 = scmp.eq.s32.totalorder %s17, 1
    %p94 = por %p92, %p93
    %p96 = scmp.ne.s32.totalorder %s81, %s95
    %p97 = scmp.eq.s32.totalorder %s17, 0
    %p98 = por %p96, %p97
    %s100 = sadd.s32 %s99, 1
    %p103 = scmp.eq.s32.totalorder %s11, 1
    %p104 = scmp.ne.s32.totalorder %s99, %s101
    %p105 = scmp.eq.s32.totalorder %s11, 0
    %p106 = por %p104, %p105
    %p107 = scmp.ne.s32.totalorder %s99, %s101
    %p108 = scmp.eq.s32.totalorder %s16, 1
    %p109 = por %p107, %p108
    %p110 = scmp.ne.s32.totalorder %s101, %s102
    %p111 = scmp.eq.s32.totalorder %s16, 0
    %p112 = por %p110, %p111
    %p113 = scmp.ne.s32.totalorder %s101, %s102
    %p114 = scmp.eq.s32.totalorder %s17, 1
    %p115 = por %p113, %p114
    %p117 = scmp.ne.s32.totalorder %s102, %s116
    %p118 = scmp.eq.s32.totalorder %s17, 0
    %p119 = por %p117, %p118
    %s121 = sadd.s32 %s120, 1
    %p124 = scmp.eq.s32.totalorder %s11, 1
    %p125 = scmp.ne.s32.totalorder %s120, %s122
    %p126 = scmp.eq.s32.totalorder %s11, 0
    %p127 = por %p125, %p126
    %p128 = scmp.ne.s32.totalorder %s120, %s122
    %p129 = scmp.eq.s32.totalorder %s16, 1
    %p130 = por %p128, %p129
    %p131 = scmp.ne.s32.totalorder %s122, %s123
    %p132 = scmp.eq.s32.totalorder %s16, 0
    %p133 = por %p131, %p132
    %p134 = scmp.ne.s32.totalorder %s122, %s123
    %p135 = scmp.eq.s32.totalorder %s17, 1
    %p136 = por %p134, %p135
    %p138 = scmp.ne.s32.totalorder %s123, %s137
    %p139 = scmp.eq.s32.totalorder %s17, 0
    %p140 = por %p138, %p139
    %s141 = ssub.s32 %s18, %s30
    %s142 = ssub.s32 %s19, %s26
    %s143 = sor.u32 %s141, %s142
    %p144 = scmp.eq.s32.totalorder %s143, 0
    %s146 = sadd.s32 %s145, 1
    %s147 = scalar_select %p144, %s145, %s146
    %p150 = pneg %p144
    %p151 = scmp.eq.s32.totalorder %s11, 1
    %p152 = por %p150, %p151
    %p153 = scmp.ne.s32.totalorder %s145, %s148
    %p154 = scmp.eq.s32.totalorder %s11, 0
    %p155 = por %p153, %p154
    %p156 = scmp.ne.s32.totalorder %s145, %s148
    %p157 = scmp.eq.s32.totalorder %s16, 1
    %p158 = por %p156, %p157
    %p159 = scmp.ne.s32.totalorder %s148, %s149
    %p160 = scmp.eq.s32.totalorder %s16, 0
    %p161 = por %p159, %p160
    %p162 = scmp.ne.s32.totalorder %s148, %s149
    %p163 = scmp.eq.s32.totalorder %s17, 1
    %p164 = por %p162, %p163
    %p166 = scmp.ne.s32.totalorder %s149, %s165
    %p167 = scmp.eq.s32.totalorder %s17, 0
    %p168 = por %p166, %p167
    %p169 = scmp.le.s32.totalorder 1, %s11
    %p170 = scmp.lt.s32.totalorder %s11, 3
    %p171 = pnand %p169, %p170
    %p172 = pneg %p171
    // Predicated region
    $region9: #{forward.2} parent=5 // pred_check
      _
    $region10: #{forward.2} parent=5 // pred_check_branch
      %174 = sbr.rel (%p171) target = $region12
    $region11: #{forward.2} parent=5 // pred_region
      %s175 = ssub.s32 %s11, 1
      // Predicated region
      $region13: #{forward.2} parent=11 // pred_check
        %p176 = pneg %p70
      $region14: #{forward.2} parent=11 // pred_check_branch
        %178 = sbr.rel (%p176) target = $region16
      $region15: #{forward.2} parent=11 // pred_region
        _
      $region16: #{forward.2} parent=11 // pred_fallthru
        _
      // Predicated region
      $region17: #{forward.2} parent=11 // pred_check
        %p179 = pneg %p91
      $region18: #{forward.2} parent=11 // pred_check_branch
        %181 = sbr.rel (%p179) target = $region20
      $region19: #{forward.2} parent=11 // pred_region
        _
      $region20: #{forward.2} parent=11 // pred_fallthru
        _
      // Predicated region
      $region21: #{forward.2} parent=11 // pred_check
        %p182 = pneg %p112
      $region22: #{forward.2} parent=11 // pred_check_branch
        %184 = sbr.rel (%p182) target = $region24
      $region23: #{forward.2} parent=11 // pred_region
        _
      $region24: #{forward.2} parent=11 // pred_fallthru
        _
      // Predicated region
      $region25: #{forward.2} parent=11 // pred_check
        %p185 = pneg %p133
      $region26: #{forward.2} parent=11 // pred_check_branch
        %187 = sbr.rel (%p185) target = $region28
      $region27: #{forward.2} parent=11 // pred_region
        _
      $region28: #{forward.2} parent=11 // pred_fallthru
        _
    $region12: #{forward.2} parent=5 // pred_fallthru
      _
    %p188 = scmp.lt.s32.totalorder %s11, 2
    // Predicated region
    $region29: #{forward.2} parent=5 // pred_check
      %p189 = pneg %p188
    $region30: #{forward.2} parent=5 // pred_check_branch
      %191 = sbr.rel (%p189) target = $region32
    $region31: #{forward.2} parent=5 // pred_region
      // Predicated region
      $region33: #{forward.2} parent=31 // pred_check
        %p192 = pneg %p43
      $region34: #{forward.2} parent=31 // pred_check_branch
        %194 = sbr.rel (%p192) target = $region36
      $region35: #{forward.2} parent=31 // pred_region
        %p195 = scmp.lt.s32.totalorder %s18, 1
        %s196 = scalar_select %p195, %s18, 1
        %s197 = smul.addr %s196, 54
        %s198 = smul.addr %s197, 8
        %s199 = scalar_lea.vmem %s0, %s198
      $region36: #{forward.2} parent=31 // pred_fallthru
        _
    $region32: #{forward.2} parent=5 // pred_fallthru
      _
    %p200 = scmp.le.s32.totalorder 1, %s11
    %p201 = scmp.lt.s32.totalorder %s11, 3
    %p202 = pnand %p200, %p201
    %p203 = pneg %p202
    // Predicated region
    $region37: #{forward.2} parent=5 // pred_check
      _
    $region38: #{forward.2} parent=5 // pred_check_branch
      %205 = sbr.rel (%p202) target = $region40
    $region39: #{forward.2} parent=5 // pred_region
      %s206 = ssub.s32 %s11, 1
      %p207 = scmp.lt.s32.totalorder %s20, 1
      %s208 = scalar_select %p207, %s20, 1
      %s209 = smul.addr %s208, 54
      %s210 = smul.addr %s209, 8
      %s211 = scalar_lea.vmem %s0, %s210
      %p212 = pneg %p49
      %p213 = pneg %p46
      %p214 = pneg %p70
      %p215 = pneg %p67
      %p216 = pneg %p91
      %p217 = pneg %p88
      %p218 = pneg %p112
      %p219 = pneg %p109
      %p220 = pneg %p133
      %p221 = pneg %p130
      %p222 = pneg %p161
      %p223 = pneg %p158
      %s224 = smul.u32 16, %s21
      %p225 = scmp.lt.s32.totalorder %s20, 1
      %s226 = scalar_select %p225, %s20, 1
      %p227 = scmp.lt.s32.totalorder %s224, 15
      %s228 = scalar_select %p227, %s224, 15
      %s229 = smul.addr %s228, 2
      %s230 = smul.addr %s226, 32
      %s231 = sadd.s32 %s229, %s230
      %s232 = smul.addr %s231, 8
      %s233 = scalar_lea.vmem %s5, %s232
      %p234 = scmp.lt.s32.totalorder %s20, 1
      %s235 = scalar_select %p234, %s20, 1
      %s236 = smul.addr %s235, 54
      %s237 = smul.addr %s236, 8
      %s238 = scalar_lea.vmem %s0, %s237
      %s239 = smul.u32 16, %s21
      %p240 = scmp.lt.s32.totalorder %s20, 1
      %s241 = scalar_select %p240, %s20, 1
      %p242 = scmp.lt.s32.totalorder %s239, 15
      %s243 = scalar_select %p242, %s239, 15
      %s244 = smul.addr %s243, 2
      %s245 = smul.addr %s241, 32
      %s246 = sadd.s32 %s244, %s245
      %s247 = smul.addr %s246, 8
      %s248 = scalar_lea.vmem %s5, %s247
      %s249 = smul.u32 16, %s21
      %s251 = smul.u32 %s21, 16
      %v252 = vld [vmem:[%s1] sm:$0x7]
      %v253 = vld [vmem:[%s1 + $0x4] sm:$0x7]
      %v254 = vld [vmem:[%s1 + $0x8] sm:$0x7]
      %s255 = smul.u32 %s251, 24
      %s256 = scalar_lea.vmem %s238, %s255
      %v257 = vld [vmem:[%s256] sm:$0xff]
      %v258 = vld [vmem:[%s256 + $0x8] sm:$0xff]
      %v259 = vld [vmem:[%s256 + $0x18] sm:$0xff]
      %v260 = vld [vmem:[%s256 + $0x20] sm:$0xff]
      %v261 = vld [vmem:[%s256 + $0x30] sm:$0xff]
      %v262 = vld [vmem:[%s256 + $0x38] sm:$0xff]
      %v263 = vld [vmem:[%s256 + $0x48] sm:$0xff]
      %v264 = vld [vmem:[%s256 + $0x50] sm:$0xff]
      %v265 = vld [vmem:[%s256 + $0x60] sm:$0xff]
      %v266 = vld [vmem:[%s256 + $0x68] sm:$0xff]
      %v267 = vld [vmem:[%s256 + $0x78] sm:$0xff]
      %v268 = vld [vmem:[%s256 + $0x80] sm:$0xff]
      %v269 = vld [vmem:[%s256 + $0x90] sm:$0xff]
      %v270 = vld [vmem:[%s256 + $0x98] sm:$0xff]
      %v271 = vld [vmem:[%s256 + $0xa8] sm:$0xff]
      %v272 = vld [vmem:[%s256 + $0xb0] sm:$0xff]
      %v273 = vld [vmem:[%s256 + $0xc0] sm:$0xff]
      %v274 = vld [vmem:[%s256 + $0xc8] sm:$0xff]
      %v275 = vld [vmem:[%s256 + $0xd8] sm:$0xff]
      %v276 = vld [vmem:[%s256 + $0xe0] sm:$0xff]
      %v277 = vld [vmem:[%s256 + $0xf0] sm:$0xff]
      %v278 = vld [vmem:[%s256 + $0xf8] sm:$0xff]
      %v279 = vld [vmem:[%s256 + $0x108] sm:$0xff]
      %v280 = vld [vmem:[%s256 + $0x110] sm:$0xff]
      %v281 = vld [vmem:[%s256 + $0x120] sm:$0xff]
      %v282 = vld [vmem:[%s256 + $0x128] sm:$0xff]
      %v283 = vld [vmem:[%s256 + $0x138] sm:$0xff]
      %v284 = vld [vmem:[%s256 + $0x140] sm:$0xff]
      %v285 = vld [vmem:[%s256 + $0x150] sm:$0xff]
      %v286 = vld [vmem:[%s256 + $0x158] sm:$0xff]
      %v287 = vld [vmem:[%s256 + $0x168] sm:$0xff]
      %v288 = vld [vmem:[%s256 + $0x170] sm:$0xff]
      %v289 = vlaneseq
      %v290 = vshrl.u32 %v289, 7
      %v291 = vsub.s32 0, %v290
      %v292 = vrot.slane %v252, %v291
      %v293 = vmul.f32 %v257, %v292
      %v294 = vmul.f32 %v258, %v292
      %v295 = vmul.f32 %v259, %v292
      %v296 = vmul.f32 %v260, %v292
      %v297 = vmul.f32 %v261, %v292
      %v298 = vmul.f32 %v262, %v292
      %v299 = vmul.f32 %v263, %v292
      %v300 = vmul.f32 %v264, %v292
      %v301 = vmul.f32 %v265, %v292
      %v302 = vmul.f32 %v266, %v292
      %v303 = vmul.f32 %v267, %v292
      %v304 = vmul.f32 %v268, %v292
      %v305 = vmul.f32 %v269, %v292
      %v306 = vmul.f32 %v270, %v292
      %v307 = vmul.f32 %v271, %v292
      %v308 = vmul.f32 %v272, %v292
      %v309 = vmul.f32 %v273, %v292
      %v310 = vmul.f32 %v274, %v292
      %v311 = vmul.f32 %v275, %v292
      %v312 = vmul.f32 %v276, %v292
      %v313 = vmul.f32 %v277, %v292
      %v314 = vmul.f32 %v278, %v292
      %v315 = vmul.f32 %v279, %v292
      %v316 = vmul.f32 %v280, %v292
      %v317 = vmul.f32 %v281, %v292
      %v318 = vmul.f32 %v282, %v292
      %v319 = vmul.f32 %v283, %v292
      %v320 = vmul.f32 %v284, %v292
      %v321 = vmul.f32 %v285, %v292
      %v322 = vmul.f32 %v286, %v292
      %v323 = vmul.f32 %v287, %v292
      %v324 = vmul.f32 %v288, %v292
      %v325 = vadd.f32 %v293, 0.0
      %v326 = vadd.f32 %v294, 0.0
      %v327 = vadd.f32 %v295, 0.0
      %v328 = vadd.f32 %v296, 0.0
      %v329 = vadd.f32 %v297, 0.0
      %v330 = vadd.f32 %v298, 0.0
      %v331 = vadd.f32 %v299, 0.0
      %v332 = vadd.f32 %v300, 0.0
      %v333 = vadd.f32 %v301, 0.0
      %v334 = vadd.f32 %v302, 0.0
      %v335 = vadd.f32 %v303, 0.0
      %v336 = vadd.f32 %v304, 0.0
      %v337 = vadd.f32 %v305, 0.0
      %v338 = vadd.f32 %v306, 0.0
      %v339 = vadd.f32 %v307, 0.0
      %v340 = vadd.f32 %v308, 0.0
      %v341 = vadd.f32 %v309, 0.0
      %v342 = vadd.f32 %v310, 0.0
      %v343 = vadd.f32 %v311, 0.0
      %v344 = vadd.f32 %v312, 0.0
      %v345 = vadd.f32 %v313, 0.0
      %v346 = vadd.f32 %v314, 0.0
      %v347 = vadd.f32 %v315, 0.0
      %v348 = vadd.f32 %v316, 0.0
      %v349 = vadd.f32 %v317, 0.0
      %v350 = vadd.f32 %v318, 0.0
      %v351 = vadd.f32 %v319, 0.0
      %v352 = vadd.f32 %v320, 0.0
      %v353 = vadd.f32 %v321, 0.0
      %v354 = vadd.f32 %v322, 0.0
      %v355 = vadd.f32 %v323, 0.0
      %v356 = vadd.f32 %v324, 0.0
      %v357 = vld [vmem:[%s256 + $0x1] sm:$0xff]
      %v358 = vld [vmem:[%s256 + $0x9] sm:$0xff]
      %v359 = vld [vmem:[%s256 + $0x19] sm:$0xff]
      %v360 = vld [vmem:[%s256 + $0x21] sm:$0xff]
      %v361 = vld [vmem:[%s256 + $0x31] sm:$0xff]
      %v362 = vld [vmem:[%s256 + $0x39] sm:$0xff]
      %v363 = vld [vmem:[%s256 + $0x49] sm:$0xff]
      %v364 = vld [vmem:[%s256 + $0x51] sm:$0xff]
      %v365 = vld [vmem:[%s256 + $0x61] sm:$0xff]
      %v366 = vld [vmem:[%s256 + $0x69] sm:$0xff]
      %v367 = vld [vmem:[%s256 + $0x79] sm:$0xff]
      %v368 = vld [vmem:[%s256 + $0x81] sm:$0xff]
      %v369 = vld [vmem:[%s256 + $0x91] sm:$0xff]
      %v370 = vld [vmem:[%s256 + $0x99] sm:$0xff]
      %v371 = vld [vmem:[%s256 + $0xa9] sm:$0xff]
      %v372 = vld [vmem:[%s256 + $0xb1] sm:$0xff]
      %v373 = vld [vmem:[%s256 + $0xc1] sm:$0xff]
      %v374 = vld [vmem:[%s256 + $0xc9] sm:$0xff]
      %v375 = vld [vmem:[%s256 + $0xd9] sm:$0xff]
      %v376 = vld [vmem:[%s256 + $0xe1] sm:$0xff]
      %v377 = vld [vmem:[%s256 + $0xf1] sm:$0xff]
      %v378 = vld [vmem:[%s256 + $0xf9] sm:$0xff]
      %v379 = vld [vmem:[%s256 + $0x109] sm:$0xff]
      %v380 = vld [vmem:[%s256 + $0x111] sm:$0xff]
      %v381 = vld [vmem:[%s256 + $0x121] sm:$0xff]
      %v382 = vld [vmem:[%s256 + $0x129] sm:$0xff]
      %v383 = vld [vmem:[%s256 + $0x139] sm:$0xff]
      %v384 = vld [vmem:[%s256 + $0x141] sm:$0xff]
      %v385 = vld [vmem:[%s256 + $0x151] sm:$0xff]
      %v386 = vld [vmem:[%s256 + $0x159] sm:$0xff]
      %v387 = vld [vmem:[%s256 + $0x169] sm:$0xff]
      %v388 = vld [vmem:[%s256 + $0x171] sm:$0xff]
      %v389 = vlaneseq
      %v390 = vshrl.u32 %v389, 7
      %v391 = vsub.s32 1, %v390
      %v392 = vrot.slane %v252, %v391
      %v393 = vmul.f32 %v357, %v392
      %v394 = vmul.f32 %v358, %v392
      %v395 = vmul.f32 %v359, %v392
      %v396 = vmul.f32 %v360, %v392
      %v397 = vmul.f32 %v361, %v392
      %v398 = vmul.f32 %v362, %v392
      %v399 = vmul.f32 %v363, %v392
      %v400 = vmul.f32 %v364, %v392
      %v401 = vmul.f32 %v365, %v392
      %v402 = vmul.f32 %v366, %v392
      %v403 = vmul.f32 %v367, %v392
      %v404 = vmul.f32 %v368, %v392
      %v405 = vmul.f32 %v369, %v392
      %v406 = vmul.f32 %v370, %v392
      %v407 = vmul.f32 %v371, %v392
      %v408 = vmul.f32 %v372, %v392
      %v409 = vmul.f32 %v373, %v392
      %v410 = vmul.f32 %v374, %v392
      %v411 = vmul.f32 %v375, %v392
      %v412 = vmul.f32 %v376, %v392
      %v413 = vmul.f32 %v377, %v392
      %v414 = vmul.f32 %v378, %v392
      %v415 = vmul.f32 %v379, %v392
      %v416 = vmul.f32 %v380, %v392
      %v417 = vmul.f32 %v381, %v392
      %v418 = vmul.f32 %v382, %v392
      %v419 = vmul.f32 %v383, %v392
      %v420 = vmul.f32 %v384, %v392
      %v421 = vmul.f32 %v385, %v392
      %v422 = vmul.f32 %v386, %v392
      %v423 = vmul.f32 %v387, %v392
      %v424 = vmul.f32 %v388, %v392
      %v425 = vadd.f32 %v325, %v393
      %v426 = vadd.f32 %v326, %v394
      %v427 = vadd.f32 %v327, %v395
      %v428 = vadd.f32 %v328, %v396
      %v429 = vadd.f32 %v329, %v397
      %v430 = vadd.f32 %v330, %v398
      %v431 = vadd.f32 %v331, %v399
      %v432 = vadd.f32 %v332, %v400
      %v433 = vadd.f32 %v333, %v401
      %v434 = vadd.f32 %v334, %v402
      %v435 = vadd.f32 %v335, %v403
      %v436 = vadd.f32 %v336, %v404
      %v437 = vadd.f32 %v337, %v405
      %v438 = vadd.f32 %v338, %v406
      %v439 = vadd.f32 %v339, %v407
      %v440 = vadd.f32 %v340, %v408
      %v441 = vadd.f32 %v341, %v409
      %v442 = vadd.f32 %v342, %v410
      %v443 = vadd.f32 %v343, %v411
      %v444 = vadd.f32 %v344, %v412
      %v445 = vadd.f32 %v345, %v413
      %v446 = vadd.f32 %v346, %v414
      %v447 = vadd.f32 %v347, %v415
      %v448 = vadd.f32 %v348, %v416
      %v449 = vadd.f32 %v349, %v417
      %v450 = vadd.f32 %v350, %v418
      %v451 = vadd.f32 %v351, %v419
      %v452 = vadd.f32 %v352, %v420
      %v453 = vadd.f32 %v353, %v421
      %v454 = vadd.f32 %v354, %v422
      %v455 = vadd.f32 %v355, %v423
      %v456 = vadd.f32 %v356, %v424
      %v457 = vld [vmem:[%s256 + $0x2] sm:$0xff]
      %v458 = vld [vmem:[%s256 + $0xa] sm:$0xff]
      %v459 = vld [vmem:[%s256 + $0x1a] sm:$0xff]
      %v460 = vld [vmem:[%s256 + $0x22] sm:$0xff]
      %v461 = vld [vmem:[%s256 + $0x32] sm:$0xff]
      %v462 = vld [vmem:[%s256 + $0x3a] sm:$0xff]
      %v463 = vld [vmem:[%s256 + $0x4a] sm:$0xff]
      %v464 = vld [vmem:[%s256 + $0x52] sm:$0xff]
      %v465 = vld [vmem:[%s256 + $0x62] sm:$0xff]
      %v466 = vld [vmem:[%s256 + $0x6a] sm:$0xff]
      %v467 = vld [vmem:[%s256 + $0x7a] sm:$0xff]
      %v468 = vld [vmem:[%s256 + $0x82] sm:$0xff]
      %v469 = vld [vmem:[%s256 + $0x92] sm:$0xff]
      %v470 = vld [vmem:[%s256 + $0x9a] sm:$0xff]
      %v471 = vld [vmem:[%s256 + $0xaa] sm:$0xff]
      %v472 = vld [vmem:[%s256 + $0xb2] sm:$0xff]
      %v473 = vld [vmem:[%s256 + $0xc2] sm:$0xff]
      %v474 = vld [vmem:[%s256 + $0xca] sm:$0xff]
      %v475 = vld [vmem:[%s256 + $0xda] sm:$0xff]
      %v476 = vld [vmem:[%s256 + $0xe2] sm:$0xff]
      %v477 = vld [vmem:[%s256 + $0xf2] sm:$0xff]
      %v478 = vld [vmem:[%s256 + $0xfa] sm:$0xff]
      %v479 = vld [vmem:[%s256 + $0x10a] sm:$0xff]
      %v480 = vld [vmem:[%s256 + $0x112] sm:$0xff]
      %v481 = vld [vmem:[%s256 + $0x122] sm:$0xff]
      %v482 = vld [vmem:[%s256 + $0x12a] sm:$0xff]
      %v483 = vld [vmem:[%s256 + $0x13a] sm:$0xff]
      %v484 = vld [vmem:[%s256 + $0x142] sm:$0xff]
      %v485 = vld [vmem:[%s256 + $0x152] sm:$0xff]
      %v486 = vld [vmem:[%s256 + $0x15a] sm:$0xff]
      %v487 = vld [vmem:[%s256 + $0x16a] sm:$0xff]
      %v488 = vld [vmem:[%s256 + $0x172] sm:$0xff]
      %v489 = vlaneseq
      %v490 = vshrl.u32 %v489, 7
      %v491 = vsub.s32 2, %v490
      %v492 = vrot.slane %v252, %v491
      %v493 = vmul.f32 %v457, %v492
      %v494 = vmul.f32 %v458, %v492
      %v495 = vmul.f32 %v459, %v492
      %v496 = vmul.f32 %v460, %v492
      %v497 = vmul.f32 %v461, %v492
      %v498 = vmul.f32 %v462, %v492
      %v499 = vmul.f32 %v463, %v492
      %v500 = vmul.f32 %v464, %v492
      %v501 = vmul.f32 %v465, %v492
      %v502 = vmul.f32 %v466, %v492
      %v503 = vmul.f32 %v467, %v492
      %v504 = vmul.f32 %v468, %v492
      %v505 = vmul.f32 %v469, %v492
      %v506 = vmul.f32 %v470, %v492
      %v507 = vmul.f32 %v471, %v492
      %v508 = vmul.f32 %v472, %v492
      %v509 = vmul.f32 %v473, %v492
      %v510 = vmul.f32 %v474, %v492
      %v511 = vmul.f32 %v475, %v492
      %v512 = vmul.f32 %v476, %v492
      %v513 = vmul.f32 %v477, %v492
      %v514 = vmul.f32 %v478, %v492
      %v515 = vmul.f32 %v479, %v492
      %v516 = vmul.f32 %v480, %v492
      %v517 = vmul.f32 %v481, %v492
      %v518 = vmul.f32 %v482, %v492
      %v519 = vmul.f32 %v483, %v492
      %v520 = vmul.f32 %v484, %v492
      %v521 = vmul.f32 %v485, %v492
      %v522 = vmul.f32 %v486, %v492
      %v523 = vmul.f32 %v487, %v492
      %v524 = vmul.f32 %v488, %v492
      %v525 = vadd.f32 %v425, %v493
      %v526 = vadd.f32 %v426, %v494
      %v527 = vadd.f32 %v427, %v495
      %v528 = vadd.f32 %v428, %v496
      %v529 = vadd.f32 %v429, %v497
      %v530 = vadd.f32 %v430, %v498
      %v531 = vadd.f32 %v431, %v499
      %v532 = vadd.f32 %v432, %v500
      %v533 = vadd.f32 %v433, %v501
      %v534 = vadd.f32 %v434, %v502
      %v535 = vadd.f32 %v435, %v503
      %v536 = vadd.f32 %v436, %v504
      %v537 = vadd.f32 %v437, %v505
      %v538 = vadd.f32 %v438, %v506
      %v539 = vadd.f32 %v439, %v507
      %v540 = vadd.f32 %v440, %v508
      %v541 = vadd.f32 %v441, %v509
      %v542 = vadd.f32 %v442, %v510
      %v543 = vadd.f32 %v443, %v511
      %v544 = vadd.f32 %v444, %v512
      %v545 = vadd.f32 %v445, %v513
      %v546 = vadd.f32 %v446, %v514
      %v547 = vadd.f32 %v447, %v515
      %v548 = vadd.f32 %v448, %v516
      %v549 = vadd.f32 %v449, %v517
      %v550 = vadd.f32 %v450, %v518
      %v551 = vadd.f32 %v451, %v519
      %v552 = vadd.f32 %v452, %v520
      %v553 = vadd.f32 %v453, %v521
      %v554 = vadd.f32 %v454, %v522
      %v555 = vadd.f32 %v455, %v523
      %v556 = vadd.f32 %v456, %v524
      %s557 = sadd.s32 %s251, 1
      %s558 = smul.u32 %s557, 24
      %s559 = scalar_lea.vmem %s238, %s558
      %v560 = vld [vmem:[%s559] sm:$0xff]
      %v561 = vld [vmem:[%s559 + $0x8] sm:$0xff]
      %v562 = vld [vmem:[%s559 + $0x18] sm:$0xff]
      %v563 = vld [vmem:[%s559 + $0x20] sm:$0xff]
      %v564 = vld [vmem:[%s559 + $0x30] sm:$0xff]
      %v565 = vld [vmem:[%s559 + $0x38] sm:$0xff]
      %v566 = vld [vmem:[%s559 + $0x48] sm:$0xff]
      %v567 = vld [vmem:[%s559 + $0x50] sm:$0xff]
      %v568 = vld [vmem:[%s559 + $0x60] sm:$0xff]
      %v569 = vld [vmem:[%s559 + $0x68] sm:$0xff]
      %v570 = vld [vmem:[%s559 + $0x78] sm:$0xff]
      %v571 = vld [vmem:[%s559 + $0x80] sm:$0xff]
      %v572 = vld [vmem:[%s559 + $0x90] sm:$0xff]
      %v573 = vld [vmem:[%s559 + $0x98] sm:$0xff]
      %v574 = vld [vmem:[%s559 + $0xa8] sm:$0xff]
      %v575 = vld [vmem:[%s559 + $0xb0] sm:$0xff]
      %v576 = vld [vmem:[%s559 + $0xc0] sm:$0xff]
      %v577 = vld [vmem:[%s559 + $0xc8] sm:$0xff]
      %v578 = vld [vmem:[%s559 + $0xd8] sm:$0xff]
      %v579 = vld [vmem:[%s559 + $0xe0] sm:$0xff]
      %v580 = vld [vmem:[%s559 + $0xf0] sm:$0xff]
      %v581 = vld [vmem:[%s559 + $0xf8] sm:$0xff]
      %v582 = vld [vmem:[%s559 + $0x108] sm:$0xff]
      %v583 = vld [vmem:[%s559 + $0x110] sm:$0xff]
      %v584 = vld [vmem:[%s559 + $0x120] sm:$0xff]
      %v585 = vld [vmem:[%s559 + $0x128] sm:$0xff]
      %v586 = vld [vmem:[%s559 + $0x138] sm:$0xff]
      %v587 = vld [vmem:[%s559 + $0x140] sm:$0xff]
      %v588 = vld [vmem:[%s559 + $0x150] sm:$0xff]
      %v589 = vld [vmem:[%s559 + $0x158] sm:$0xff]
      %v590 = vld [vmem:[%s559 + $0x168] sm:$0xff]
      %v591 = vld [vmem:[%s559 + $0x170] sm:$0xff]
      %v592 = vlaneseq
      %v593 = vshrl.u32 %v592, 7
      %v594 = vsub.s32 0, %v593
      %v595 = vrot.slane %v253, %v594
      %v596 = vmul.f32 %v560, %v595
      %v597 = vmul.f32 %v561, %v595
      %v598 = vmul.f32 %v562, %v595
      %v599 = vmul.f32 %v563, %v595
      %v600 = vmul.f32 %v564, %v595
      %v601 = vmul.f32 %v565, %v595
      %v602 = vmul.f32 %v566, %v595
      %v603 = vmul.f32 %v567, %v595
      %v604 = vmul.f32 %v568, %v595
      %v605 = vmul.f32 %v569, %v595
      %v606 = vmul.f32 %v570, %v595
      %v607 = vmul.f32 %v571, %v595
      %v608 = vmul.f32 %v572, %v595
      %v609 = vmul.f32 %v573, %v595
      %v610 = vmul.f32 %v574, %v595
      %v611 = vmul.f32 %v575, %v595
      %v612 = vmul.f32 %v576, %v595
      %v613 = vmul.f32 %v577, %v595
      %v614 = vmul.f32 %v578, %v595
      %v615 = vmul.f32 %v579, %v595
      %v616 = vmul.f32 %v580, %v595
      %v617 = vmul.f32 %v581, %v595
      %v618 = vmul.f32 %v582, %v595
      %v619 = vmul.f32 %v583, %v595
      %v620 = vmul.f32 %v584, %v595
      %v621 = vmul.f32 %v585, %v595
      %v622 = vmul.f32 %v586, %v595
      %v623 = vmul.f32 %v587, %v595
      %v624 = vmul.f32 %v588, %v595
      %v625 = vmul.f32 %v589, %v595
      %v626 = vmul.f32 %v590, %v595
      %v627 = vmul.f32 %v591, %v595
      %v628 = vadd.f32 %v525, %v596
      %v629 = vadd.f32 %v526, %v597
      %v630 = vadd.f32 %v527, %v598
      %v631 = vadd.f32 %v528, %v599
      %v632 = vadd.f32 %v529, %v600
      %v633 = vadd.f32 %v530, %v601
      %v634 = vadd.f32 %v531, %v602
      %v635 = vadd.f32 %v532, %v603
      %v636 = vadd.f32 %v533, %v604
      %v637 = vadd.f32 %v534, %v605
      %v638 = vadd.f32 %v535, %v606
      %v639 = vadd.f32 %v536, %v607
      %v640 = vadd.f32 %v537, %v608
      %v641 = vadd.f32 %v538, %v609
      %v642 = vadd.f32 %v539, %v610
      %v643 = vadd.f32 %v540, %v611
      %v644 = vadd.f32 %v541, %v612
      %v645 = vadd.f32 %v542, %v613
      %v646 = vadd.f32 %v543, %v614
      %v647 = vadd.f32 %v544, %v615
      %v648 = vadd.f32 %v545, %v616
      %v649 = vadd.f32 %v546, %v617
      %v650 = vadd.f32 %v547, %v618
      %v651 = vadd.f32 %v548, %v619
      %v652 = vadd.f32 %v549, %v620
      %v653 = vadd.f32 %v550, %v621
      %v654 = vadd.f32 %v551, %v622
      %v655 = vadd.f32 %v552, %v623
      %v656 = vadd.f32 %v553, %v624
      %v657 = vadd.f32 %v554, %v625
      %v658 = vadd.f32 %v555, %v626
      %v659 = vadd.f32 %v556, %v627
      %v660 = vld [vmem:[%s559 + $0x1] sm:$0xff]
      %v661 = vld [vmem:[%s559 + $0x9] sm:$0xff]
      %v662 = vld [vmem:[%s559 + $0x19] sm:$0xff]
      %v663 = vld [vmem:[%s559 + $0x21] sm:$0xff]
      %v664 = vld [vmem:[%s559 + $0x31] sm:$0xff]
      %v665 = vld [vmem:[%s559 + $0x39] sm:$0xff]
      %v666 = vld [vmem:[%s559 + $0x49] sm:$0xff]
      %v667 = vld [vmem:[%s559 + $0x51] sm:$0xff]
      %v668 = vld [vmem:[%s559 + $0x61] sm:$0xff]
      %v669 = vld [vmem:[%s559 + $0x69] sm:$0xff]
      %v670 = vld [vmem:[%s559 + $0x79] sm:$0xff]
      %v671 = vld [vmem:[%s559 + $0x81] sm:$0xff]
      %v672 = vld [vmem:[%s559 + $0x91] sm:$0xff]
      %v673 = vld [vmem:[%s559 + $0x99] sm:$0xff]
      %v674 = vld [vmem:[%s559 + $0xa9] sm:$0xff]
      %v675 = vld [vmem:[%s559 + $0xb1] sm:$0xff]
      %v676 = vld [vmem:[%s559 + $0xc1] sm:$0xff]
      %v677 = vld [vmem:[%s559 + $0xc9] sm:$0xff]
      %v678 = vld [vmem:[%s559 + $0xd9] sm:$0xff]
      %v679 = vld [vmem:[%s559 + $0xe1] sm:$0xff]
      %v680 = vld [vmem:[%s559 + $0xf1] sm:$0xff]
      %v681 = vld [vmem:[%s559 + $0xf9] sm:$0xff]
      %v682 = vld [vmem:[%s559 + $0x109] sm:$0xff]
      %v683 = vld [vmem:[%s559 + $0x111] sm:$0xff]
      %v684 = vld [vmem:[%s559 + $0x121] sm:$0xff]
      %v685 = vld [vmem:[%s559 + $0x129] sm:$0xff]
      %v686 = vld [vmem:[%s559 + $0x139] sm:$0xff]
      %v687 = vld [vmem:[%s559 + $0x141] sm:$0xff]
      %v688 = vld [vmem:[%s559 + $0x151] sm:$0xff]
      %v689 = vld [vmem:[%s559 + $0x159] sm:$0xff]
      %v690 = vld [vmem:[%s559 + $0x169] sm:$0xff]
      %v691 = vld [vmem:[%s559 + $0x171] sm:$0xff]
      %v692 = vlaneseq
      %v693 = vshrl.u32 %v692, 7
      %v694 = vsub.s32 1, %v693
      %v695 = vrot.slane %v253, %v694
      %v696 = vmul.f32 %v660, %v695
      %v697 = vmul.f32 %v661, %v695
      %v698 = vmul.f32 %v662, %v695
      %v699 = vmul.f32 %v663, %v695
      %v700 = vmul.f32 %v664, %v695
      %v701 = vmul.f32 %v665, %v695
      %v702 = vmul.f32 %v666, %v695
      %v703 = vmul.f32 %v667, %v695
      %v704 = vmul.f32 %v668, %v695
      %v705 = vmul.f32 %v669, %v695
      %v706 = vmul.f32 %v670, %v695
      %v707 = vmul.f32 %v671, %v695
      %v708 = vmul.f32 %v672, %v695
      %v709 = vmul.f32 %v673, %v695
      %v710 = vmul.f32 %v674, %v695
      %v711 = vmul.f32 %v675, %v695
      %v712 = vmul.f32 %v676, %v695
      %v713 = vmul.f32 %v677, %v695
      %v714 = vmul.f32 %v678, %v695
      %v715 = vmul.f32 %v679, %v695
      %v716 = vmul.f32 %v680, %v695
      %v717 = vmul.f32 %v681, %v695
      %v718 = vmul.f32 %v682, %v695
      %v719 = vmul.f32 %v683, %v695
      %v720 = vmul.f32 %v684, %v695
      %v721 = vmul.f32 %v685, %v695
      %v722 = vmul.f32 %v686, %v695
      %v723 = vmul.f32 %v687, %v695
      %v724 = vmul.f32 %v688, %v695
      %v725 = vmul.f32 %v689, %v695
      %v726 = vmul.f32 %v690, %v695
      %v727 = vmul.f32 %v691, %v695
      %v728 = vadd.f32 %v628, %v696
      %v729 = vadd.f32 %v629, %v697
      %v730 = vadd.f32 %v630, %v698
      %v731 = vadd.f32 %v631, %v699
      %v732 = vadd.f32 %v632, %v700
      %v733 = vadd.f32 %v633, %v701
      %v734 = vadd.f32 %v634, %v702
      %v735 = vadd.f32 %v635, %v703
      %v736 = vadd.f32 %v636, %v704
      %v737 = vadd.f32 %v637, %v705
      %v738 = vadd.f32 %v638, %v706
      %v739 = vadd.f32 %v639, %v707
      %v740 = vadd.f32 %v640, %v708
      %v741 = vadd.f32 %v641, %v709
      %v742 = vadd.f32 %v642, %v710
      %v743 = vadd.f32 %v643, %v711
      %v744 = vadd.f32 %v644, %v712
      %v745 = vadd.f32 %v645, %v713
      %v746 = vadd.f32 %v646, %v714
      %v747 = vadd.f32 %v647, %v715
      %v748 = vadd.f32 %v648, %v716
      %v749 = vadd.f32 %v649, %v717
      %v750 = vadd.f32 %v650, %v718
      %v751 = vadd.f32 %v651, %v719
      %v752 = vadd.f32 %v652, %v720
      %v753 = vadd.f32 %v653, %v721
      %v754 = vadd.f32 %v654, %v722
      %v755 = vadd.f32 %v655, %v723
      %v756 = vadd.f32 %v656, %v724
      %v757 = vadd.f32 %v657, %v725
      %v758 = vadd.f32 %v658, %v726
      %v759 = vadd.f32 %v659, %v727
      %v760 = vld [vmem:[%s559 + $0x2] sm:$0xff]
      %v761 = vld [vmem:[%s559 + $0xa] sm:$0xff]
      %v762 = vld [vmem:[%s559 + $0x1a] sm:$0xff]
      %v763 = vld [vmem:[%s559 + $0x22] sm:$0xff]
      %v764 = vld [vmem:[%s559 + $0x32] sm:$0xff]
      %v765 = vld [vmem:[%s559 + $0x3a] sm:$0xff]
      %v766 = vld [vmem:[%s559 + $0x4a] sm:$0xff]
      %v767 = vld [vmem:[%s559 + $0x52] sm:$0xff]
      %v768 = vld [vmem:[%s559 + $0x62] sm:$0xff]
      %v769 = vld [vmem:[%s559 + $0x6a] sm:$0xff]
      %v770 = vld [vmem:[%s559 + $0x7a] sm:$0xff]
      %v771 = vld [vmem:[%s559 + $0x82] sm:$0xff]
      %v772 = vld [vmem:[%s559 + $0x92] sm:$0xff]
      %v773 = vld [vmem:[%s559 + $0x9a] sm:$0xff]
      %v774 = vld [vmem:[%s559 + $0xaa] sm:$0xff]
      %v775 = vld [vmem:[%s559 + $0xb2] sm:$0xff]
      %v776 = vld [vmem:[%s559 + $0xc2] sm:$0xff]
      %v777 = vld [vmem:[%s559 + $0xca] sm:$0xff]
      %v778 = vld [vmem:[%s559 + $0xda] sm:$0xff]
      %v779 = vld [vmem:[%s559 + $0xe2] sm:$0xff]
      %v780 = vld [vmem:[%s559 + $0xf2] sm:$0xff]
      %v781 = vld [vmem:[%s559 + $0xfa] sm:$0xff]
      %v782 = vld [vmem:[%s559 + $0x10a] sm:$0xff]
      %v783 = vld [vmem:[%s559 + $0x112] sm:$0xff]
      %v784 = vld [vmem:[%s559 + $0x122] sm:$0xff]
      %v785 = vld [vmem:[%s559 + $0x12a] sm:$0xff]
      %v786 = vld [vmem:[%s559 + $0x13a] sm:$0xff]
      %v787 = vld [vmem:[%s559 + $0x142] sm:$0xff]
      %v788 = vld [vmem:[%s559 + $0x152] sm:$0xff]
      %v789 = vld [vmem:[%s559 + $0x15a] sm:$0xff]
      %v790 = vld [vmem:[%s559 + $0x16a] sm:$0xff]
      %v791 = vld [vmem:[%s559 + $0x172] sm:$0xff]
      %v792 = vlaneseq
      %v793 = vshrl.u32 %v792, 7
      %v794 = vsub.s32 2, %v793
      %v795 = vrot.slane %v253, %v794
      %v796 = vmul.f32 %v760, %v795
      %v797 = vmul.f32 %v761, %v795
      %v798 = vmul.f32 %v762, %v795
      %v799 = vmul.f32 %v763, %v795
      %v800 = vmul.f32 %v764, %v795
      %v801 = vmul.f32 %v765, %v795
      %v802 = vmul.f32 %v766, %v795
      %v803 = vmul.f32 %v767, %v795
      %v804 = vmul.f32 %v768, %v795
      %v805 = vmul.f32 %v769, %v795
      %v806 = vmul.f32 %v770, %v795
      %v807 = vmul.f32 %v771, %v795
      %v808 = vmul.f32 %v772, %v795
      %v809 = vmul.f32 %v773, %v795
      %v810 = vmul.f32 %v774, %v795
      %v811 = vmul.f32 %v775, %v795
      %v812 = vmul.f32 %v776, %v795
      %v813 = vmul.f32 %v777, %v795
      %v814 = vmul.f32 %v778, %v795
      %v815 = vmul.f32 %v779, %v795
      %v816 = vmul.f32 %v780, %v795
      %v817 = vmul.f32 %v781, %v795
      %v818 = vmul.f32 %v782, %v795
      %v819 = vmul.f32 %v783, %v795
      %v820 = vmul.f32 %v784, %v795
      %v821 = vmul.f32 %v785, %v795
      %v822 = vmul.f32 %v786, %v795
      %v823 = vmul.f32 %v787, %v795
      %v824 = vmul.f32 %v788, %v795
      %v825 = vmul.f32 %v789, %v795
      %v826 = vmul.f32 %v790, %v795
      %v827 = vmul.f32 %v791, %v795
      %v828 = vadd.f32 %v728, %v796
      %v829 = vadd.f32 %v729, %v797
      %v830 = vadd.f32 %v730, %v798
      %v831 = vadd.f32 %v731, %v799
      %v832 = vadd.f32 %v732, %v800
      %v833 = vadd.f32 %v733, %v801
      %v834 = vadd.f32 %v734, %v802
      %v835 = vadd.f32 %v735, %v803
      %v836 = vadd.f32 %v736, %v804
      %v837 = vadd.f32 %v737, %v805
      %v838 = vadd.f32 %v738, %v806
      %v839 = vadd.f32 %v739, %v807
      %v840 = vadd.f32 %v740, %v808
      %v841 = vadd.f32 %v741, %v809
      %v842 = vadd.f32 %v742, %v810
      %v843 = vadd.f32 %v743, %v811
      %v844 = vadd.f32 %v744, %v812
      %v845 = vadd.f32 %v745, %v813
      %v846 = vadd.f32 %v746, %v814
      %v847 = vadd.f32 %v747, %v815
      %v848 = vadd.f32 %v748, %v816
      %v849 = vadd.f32 %v749, %v817
      %v850 = vadd.f32 %v750, %v818
      %v851 = vadd.f32 %v751, %v819
      %v852 = vadd.f32 %v752, %v820
      %v853 = vadd.f32 %v753, %v821
      %v854 = vadd.f32 %v754, %v822
      %v855 = vadd.f32 %v755, %v823
      %v856 = vadd.f32 %v756, %v824
      %v857 = vadd.f32 %v757, %v825
      %v858 = vadd.f32 %v758, %v826
      %v859 = vadd.f32 %v759, %v827
      %s860 = sadd.s32 %s251, 2
      %s861 = smul.u32 %s860, 24
      %s862 = scalar_lea.vmem %s238, %s861
      %v863 = vld [vmem:[%s862] sm:$0xff]
      %v864 = vld [vmem:[%s862 + $0x8] sm:$0xff]
      %v865 = vld [vmem:[%s862 + $0x18] sm:$0xff]
      %v866 = vld [vmem:[%s862 + $0x20] sm:$0xff]
      %v867 = vld [vmem:[%s862 + $0x30] sm:$0xff]
      %v868 = vld [vmem:[%s862 + $0x38] sm:$0xff]
      %v869 = vld [vmem:[%s862 + $0x48] sm:$0xff]
      %v870 = vld [vmem:[%s862 + $0x50] sm:$0xff]
      %v871 = vld [vmem:[%s862 + $0x60] sm:$0xff]
      %v872 = vld [vmem:[%s862 + $0x68] sm:$0xff]
      %v873 = vld [vmem:[%s862 + $0x78] sm:$0xff]
      %v874 = vld [vmem:[%s862 + $0x80] sm:$0xff]
      %v875 = vld [vmem:[%s862 + $0x90] sm:$0xff]
      %v876 = vld [vmem:[%s862 + $0x98] sm:$0xff]
      %v877 = vld [vmem:[%s862 + $0xa8] sm:$0xff]
      %v878 = vld [vmem:[%s862 + $0xb0] sm:$0xff]
      %v879 = vld [vmem:[%s862 + $0xc0] sm:$0xff]
      %v880 = vld [vmem:[%s862 + $0xc8] sm:$0xff]
      %v881 = vld [vmem:[%s862 + $0xd8] sm:$0xff]
      %v882 = vld [vmem:[%s862 + $0xe0] sm:$0xff]
      %v883 = vld [vmem:[%s862 + $0xf0] sm:$0xff]
      %v884 = vld [vmem:[%s862 + $0xf8] sm:$0xff]
      %v885 = vld [vmem:[%s862 + $0x108] sm:$0xff]
      %v886 = vld [vmem:[%s862 + $0x110] sm:$0xff]
      %v887 = vld [vmem:[%s862 + $0x120] sm:$0xff]
      %v888 = vld [vmem:[%s862 + $0x128] sm:$0xff]
      %v889 = vld [vmem:[%s862 + $0x138] sm:$0xff]
      %v890 = vld [vmem:[%s862 + $0x140] sm:$0xff]
      %v891 = vld [vmem:[%s862 + $0x150] sm:$0xff]
      %v892 = vld [vmem:[%s862 + $0x158] sm:$0xff]
      %v893 = vld [vmem:[%s862 + $0x168] sm:$0xff]
      %v894 = vld [vmem:[%s862 + $0x170] sm:$0xff]
      %v895 = vlaneseq
      %v896 = vshrl.u32 %v895, 7
      %v897 = vsub.s32 0, %v896
      %v898 = vrot.slane %v254, %v897
      %v899 = vmul.f32 %v863, %v898
      %v900 = vmul.f32 %v864, %v898
      %v901 = vmul.f32 %v865, %v898
      %v902 = vmul.f32 %v866, %v898
      %v903 = vmul.f32 %v867, %v898
      %v904 = vmul.f32 %v868, %v898
      %v905 = vmul.f32 %v869, %v898
      %v906 = vmul.f32 %v870, %v898
      %v907 = vmul.f32 %v871, %v898
      %v908 = vmul.f32 %v872, %v898
      %v909 = vmul.f32 %v873, %v898
      %v910 = vmul.f32 %v874, %v898
      %v911 = vmul.f32 %v875, %v898
      %v912 = vmul.f32 %v876, %v898
      %v913 = vmul.f32 %v877, %v898
      %v914 = vmul.f32 %v878, %v898
      %v915 = vmul.f32 %v879, %v898
      %v916 = vmul.f32 %v880, %v898
      %v917 = vmul.f32 %v881, %v898
      %v918 = vmul.f32 %v882, %v898
      %v919 = vmul.f32 %v883, %v898
      %v920 = vmul.f32 %v884, %v898
      %v921 = vmul.f32 %v885, %v898
      %v922 = vmul.f32 %v886, %v898
      %v923 = vmul.f32 %v887, %v898
      %v924 = vmul.f32 %v888, %v898
      %v925 = vmul.f32 %v889, %v898
      %v926 = vmul.f32 %v890, %v898
      %v927 = vmul.f32 %v891, %v898
      %v928 = vmul.f32 %v892, %v898
      %v929 = vmul.f32 %v893, %v898
      %v930 = vmul.f32 %v894, %v898
      %v931 = vadd.f32 %v828, %v899
      %v932 = vadd.f32 %v829, %v900
      %v933 = vadd.f32 %v830, %v901
      %v934 = vadd.f32 %v831, %v902
      %v935 = vadd.f32 %v832, %v903
      %v936 = vadd.f32 %v833, %v904
      %v937 = vadd.f32 %v834, %v905
      %v938 = vadd.f32 %v835, %v906
      %v939 = vadd.f32 %v836, %v907
      %v940 = vadd.f32 %v837, %v908
      %v941 = vadd.f32 %v838, %v909
      %v942 = vadd.f32 %v839, %v910
      %v943 = vadd.f32 %v840, %v911
      %v944 = vadd.f32 %v841, %v912
      %v945 = vadd.f32 %v842, %v913
      %v946 = vadd.f32 %v843, %v914
      %v947 = vadd.f32 %v844, %v915
      %v948 = vadd.f32 %v845, %v916
      %v949 = vadd.f32 %v846, %v917
      %v950 = vadd.f32 %v847, %v918
      %v951 = vadd.f32 %v848, %v919
      %v952 = vadd.f32 %v849, %v920
      %v953 = vadd.f32 %v850, %v921
      %v954 = vadd.f32 %v851, %v922
      %v955 = vadd.f32 %v852, %v923
      %v956 = vadd.f32 %v853, %v924
      %v957 = vadd.f32 %v854, %v925
      %v958 = vadd.f32 %v855, %v926
      %v959 = vadd.f32 %v856, %v927
      %v960 = vadd.f32 %v857, %v928
      %v961 = vadd.f32 %v858, %v929
      %v962 = vadd.f32 %v859, %v930
      %v963 = vld [vmem:[%s862 + $0x1] sm:$0xff]
      %v964 = vld [vmem:[%s862 + $0x9] sm:$0xff]
      %v965 = vld [vmem:[%s862 + $0x19] sm:$0xff]
      %v966 = vld [vmem:[%s862 + $0x21] sm:$0xff]
      %v967 = vld [vmem:[%s862 + $0x31] sm:$0xff]
      %v968 = vld [vmem:[%s862 + $0x39] sm:$0xff]
      %v969 = vld [vmem:[%s862 + $0x49] sm:$0xff]
      %v970 = vld [vmem:[%s862 + $0x51] sm:$0xff]
      %v971 = vld [vmem:[%s862 + $0x61] sm:$0xff]
      %v972 = vld [vmem:[%s862 + $0x69] sm:$0xff]
      %v973 = vld [vmem:[%s862 + $0x79] sm:$0xff]
      %v974 = vld [vmem:[%s862 + $0x81] sm:$0xff]
      %v975 = vld [vmem:[%s862 + $0x91] sm:$0xff]
      %v976 = vld [vmem:[%s862 + $0x99] sm:$0xff]
      %v977 = vld [vmem:[%s862 + $0xa9] sm:$0xff]
      %v978 = vld [vmem:[%s862 + $0xb1] sm:$0xff]
      %v979 = vld [vmem:[%s862 + $0xc1] sm:$0xff]
      %v980 = vld [vmem:[%s862 + $0xc9] sm:$0xff]
      %v981 = vld [vmem:[%s862 + $0xd9] sm:$0xff]
      %v982 = vld [vmem:[%s862 + $0xe1] sm:$0xff]
      %v983 = vld [vmem:[%s862 + $0xf1] sm:$0xff]
      %v984 = vld [vmem:[%s862 + $0xf9] sm:$0xff]
      %v985 = vld [vmem:[%s862 + $0x109] sm:$0xff]
      %v986 = vld [vmem:[%s862 + $0x111] sm:$0xff]
      %v987 = vld [vmem:[%s862 + $0x121] sm:$0xff]
      %v988 = vld [vmem:[%s862 + $0x129] sm:$0xff]
      %v989 = vld [vmem:[%s862 + $0x139] sm:$0xff]
      %v990 = vld [vmem:[%s862 + $0x141] sm:$0xff]
      %v991 = vld [vmem:[%s862 + $0x151] sm:$0xff]
      %v992 = vld [vmem:[%s862 + $0x159] sm:$0xff]
      %v993 = vld [vmem:[%s862 + $0x169] sm:$0xff]
      %v994 = vld [vmem:[%s862 + $0x171] sm:$0xff]
      %v995 = vlaneseq
      %v996 = vshrl.u32 %v995, 7
      %v997 = vsub.s32 1, %v996
      %v998 = vrot.slane %v254, %v997
      %v999 = vmul.f32 %v963, %v998
      %v1000 = vmul.f32 %v964, %v998
      %v1001 = vmul.f32 %v965, %v998
      %v1002 = vmul.f32 %v966, %v998
      %v1003 = vmul.f32 %v967, %v998
      %v1004 = vmul.f32 %v968, %v998
      %v1005 = vmul.f32 %v969, %v998
      %v1006 = vmul.f32 %v970, %v998
      %v1007 = vmul.f32 %v971, %v998
      %v1008 = vmul.f32 %v972, %v998
      %v1009 = vmul.f32 %v973, %v998
      %v1010 = vmul.f32 %v974, %v998
      %v1011 = vmul.f32 %v975, %v998
      %v1012 = vmul.f32 %v976, %v998
      %v1013 = vmul.f32 %v977, %v998
      %v1014 = vmul.f32 %v978, %v998
      %v1015 = vmul.f32 %v979, %v998
      %v1016 = vmul.f32 %v980, %v998
      %v1017 = vmul.f32 %v981, %v998
      %v1018 = vmul.f32 %v982, %v998
      %v1019 = vmul.f32 %v983, %v998
      %v1020 = vmul.f32 %v984, %v998
      %v1021 = vmul.f32 %v985, %v998
      %v1022 = vmul.f32 %v986, %v998
      %v1023 = vmul.f32 %v987, %v998
      %v1024 = vmul.f32 %v988, %v998
      %v1025 = vmul.f32 %v989, %v998
      %v1026 = vmul.f32 %v990, %v998
      %v1027 = vmul.f32 %v991, %v998
      %v1028 = vmul.f32 %v992, %v998
      %v1029 = vmul.f32 %v993, %v998
      %v1030 = vmul.f32 %v994, %v998
      %v1031 = vadd.f32 %v931, %v999
      %v1032 = vadd.f32 %v932, %v1000
      %v1033 = vadd.f32 %v933, %v1001
      %v1034 = vadd.f32 %v934, %v1002
      %v1035 = vadd.f32 %v935, %v1003
      %v1036 = vadd.f32 %v936, %v1004
      %v1037 = vadd.f32 %v937, %v1005
      %v1038 = vadd.f32 %v938, %v1006
      %v1039 = vadd.f32 %v939, %v1007
      %v1040 = vadd.f32 %v940, %v1008
      %v1041 = vadd.f32 %v941, %v1009
      %v1042 = vadd.f32 %v942, %v1010
      %v1043 = vadd.f32 %v943, %v1011
      %v1044 = vadd.f32 %v944, %v1012
      %v1045 = vadd.f32 %v945, %v1013
      %v1046 = vadd.f32 %v946, %v1014
      %v1047 = vadd.f32 %v947, %v1015
      %v1048 = vadd.f32 %v948, %v1016
      %v1049 = vadd.f32 %v949, %v1017
      %v1050 = vadd.f32 %v950, %v1018
      %v1051 = vadd.f32 %v951, %v1019
      %v1052 = vadd.f32 %v952, %v1020
      %v1053 = vadd.f32 %v953, %v1021
      %v1054 = vadd.f32 %v954, %v1022
      %v1055 = vadd.f32 %v955, %v1023
      %v1056 = vadd.f32 %v956, %v1024
      %v1057 = vadd.f32 %v957, %v1025
      %v1058 = vadd.f32 %v958, %v1026
      %v1059 = vadd.f32 %v959, %v1027
      %v1060 = vadd.f32 %v960, %v1028
      %v1061 = vadd.f32 %v961, %v1029
      %v1062 = vadd.f32 %v962, %v1030
      %v1063 = vld [vmem:[%s862 + $0x2] sm:$0xff]
      %v1064 = vld [vmem:[%s862 + $0xa] sm:$0xff]
      %v1065 = vld [vmem:[%s862 + $0x1a] sm:$0xff]
      %v1066 = vld [vmem:[%s862 + $0x22] sm:$0xff]
      %v1067 = vld [vmem:[%s862 + $0x32] sm:$0xff]
      %v1068 = vld [vmem:[%s862 + $0x3a] sm:$0xff]
      %v1069 = vld [vmem:[%s862 + $0x4a] sm:$0xff]
      %v1070 = vld [vmem:[%s862 + $0x52] sm:$0xff]
      %v1071 = vld [vmem:[%s862 + $0x62] sm:$0xff]
      %v1072 = vld [vmem:[%s862 + $0x6a] sm:$0xff]
      %v1073 = vld [vmem:[%s862 + $0x7a] sm:$0xff]
      %v1074 = vld [vmem:[%s862 + $0x82] sm:$0xff]
      %v1075 = vld [vmem:[%s862 + $0x92] sm:$0xff]
      %v1076 = vld [vmem:[%s862 + $0x9a] sm:$0xff]
      %v1077 = vld [vmem:[%s862 + $0xaa] sm:$0xff]
      %v1078 = vld [vmem:[%s862 + $0xb2] sm:$0xff]
      %v1079 = vld [vmem:[%s862 + $0xc2] sm:$0xff]
      %v1080 = vld [vmem:[%s862 + $0xca] sm:$0xff]
      %v1081 = vld [vmem:[%s862 + $0xda] sm:$0xff]
      %v1082 = vld [vmem:[%s862 + $0xe2] sm:$0xff]
      %v1083 = vld [vmem:[%s862 + $0xf2] sm:$0xff]
      %v1084 = vld [vmem:[%s862 + $0xfa] sm:$0xff]
      %v1085 = vld [vmem:[%s862 + $0x10a] sm:$0xff]
      %v1086 = vld [vmem:[%s862 + $0x112] sm:$0xff]
      %v1087 = vld [vmem:[%s862 + $0x122] sm:$0xff]
      %v1088 = vld [vmem:[%s862 + $0x12a] sm:$0xff]
      %v1089 = vld [vmem:[%s862 + $0x13a] sm:$0xff]
      %v1090 = vld [vmem:[%s862 + $0x142] sm:$0xff]
      %v1091 = vld [vmem:[%s862 + $0x152] sm:$0xff]
      %v1092 = vld [vmem:[%s862 + $0x15a] sm:$0xff]
      %v1093 = vld [vmem:[%s862 + $0x16a] sm:$0xff]
      %v1094 = vld [vmem:[%s862 + $0x172] sm:$0xff]
      %v1095 = vlaneseq
      %v1096 = vshrl.u32 %v1095, 7
      %v1097 = vsub.s32 2, %v1096
      %v1098 = vrot.slane %v254, %v1097
      %v1099 = vmul.f32 %v1063, %v1098
      %v1100 = vmul.f32 %v1064, %v1098
      %v1101 = vmul.f32 %v1065, %v1098
      %v1102 = vmul.f32 %v1066, %v1098
      %v1103 = vmul.f32 %v1067, %v1098
      %v1104 = vmul.f32 %v1068, %v1098
      %v1105 = vmul.f32 %v1069, %v1098
      %v1106 = vmul.f32 %v1070, %v1098
      %v1107 = vmul.f32 %v1071, %v1098
      %v1108 = vmul.f32 %v1072, %v1098
      %v1109 = vmul.f32 %v1073, %v1098
      %v1110 = vmul.f32 %v1074, %v1098
      %v1111 = vmul.f32 %v1075, %v1098
      %v1112 = vmul.f32 %v1076, %v1098
      %v1113 = vmul.f32 %v1077, %v1098
      %v1114 = vmul.f32 %v1078, %v1098
      %v1115 = vmul.f32 %v1079, %v1098
      %v1116 = vmul.f32 %v1080, %v1098
      %v1117 = vmul.f32 %v1081, %v1098
      %v1118 = vmul.f32 %v1082, %v1098
      %v1119 = vmul.f32 %v1083, %v1098
      %v1120 = vmul.f32 %v1084, %v1098
      %v1121 = vmul.f32 %v1085, %v1098
      %v1122 = vmul.f32 %v1086, %v1098
      %v1123 = vmul.f32 %v1087, %v1098
      %v1124 = vmul.f32 %v1088, %v1098
      %v1125 = vmul.f32 %v1089, %v1098
      %v1126 = vmul.f32 %v1090, %v1098
      %v1127 = vmul.f32 %v1091, %v1098
      %v1128 = vmul.f32 %v1092, %v1098
      %v1129 = vmul.f32 %v1093, %v1098
      %v1130 = vmul.f32 %v1094, %v1098
      %v1131 = vadd.f32 %v1031, %v1099
      %v1132 = vadd.f32 %v1032, %v1100
      %v1133 = vadd.f32 %v1033, %v1101
      %v1134 = vadd.f32 %v1034, %v1102
      %v1135 = vadd.f32 %v1035, %v1103
      %v1136 = vadd.f32 %v1036, %v1104
      %v1137 = vadd.f32 %v1037, %v1105
      %v1138 = vadd.f32 %v1038, %v1106
      %v1139 = vadd.f32 %v1039, %v1107
      %v1140 = vadd.f32 %v1040, %v1108
      %v1141 = vadd.f32 %v1041, %v1109
      %v1142 = vadd.f32 %v1042, %v1110
      %v1143 = vadd.f32 %v1043, %v1111
      %v1144 = vadd.f32 %v1044, %v1112
      %v1145 = vadd.f32 %v1045, %v1113
      %v1146 = vadd.f32 %v1046, %v1114
      %v1147 = vadd.f32 %v1047, %v1115
      %v1148 = vadd.f32 %v1048, %v1116
      %v1149 = vadd.f32 %v1049, %v1117
      %v1150 = vadd.f32 %v1050, %v1118
      %v1151 = vadd.f32 %v1051, %v1119
      %v1152 = vadd.f32 %v1052, %v1120
      %v1153 = vadd.f32 %v1053, %v1121
      %v1154 = vadd.f32 %v1054, %v1122
      %v1155 = vadd.f32 %v1055, %v1123
      %v1156 = vadd.f32 %v1056, %v1124
      %v1157 = vadd.f32 %v1057, %v1125
      %v1158 = vadd.f32 %v1058, %v1126
      %v1159 = vadd.f32 %v1059, %v1127
      %v1160 = vadd.f32 %v1060, %v1128
      %v1161 = vadd.f32 %v1061, %v1129
      %v1162 = vadd.f32 %v1062, %v1130
      %v1163 = vld [vmem:[%s2] sm:$0x1]
      %v1165 = vlaneseq
      %v1166 = vshrl.u32 %v1165, 7
      %v1167 = vsub.s32 0, %v1166
      %v1168 = vrot.slane %v1163, %v1167
      %v1170 = vadd.f32 %v1131, %v1168
      %v1171 = vadd.f32 %v1132, %v1168
      %v1172 = vadd.f32 %v1133, %v1168
      %v1173 = vadd.f32 %v1134, %v1168
      %v1174 = vadd.f32 %v1135, %v1168
      %v1175 = vadd.f32 %v1136, %v1168
      %v1176 = vadd.f32 %v1137, %v1168
      %v1177 = vadd.f32 %v1138, %v1168
      %v1178 = vadd.f32 %v1139, %v1168
      %v1179 = vadd.f32 %v1140, %v1168
      %v1180 = vadd.f32 %v1141, %v1168
      %v1181 = vadd.f32 %v1142, %v1168
      %v1182 = vadd.f32 %v1143, %v1168
      %v1183 = vadd.f32 %v1144, %v1168
      %v1184 = vadd.f32 %v1145, %v1168
      %v1185 = vadd.f32 %v1146, %v1168
      %v1186 = vadd.f32 %v1147, %v1168
      %v1187 = vadd.f32 %v1148, %v1168
      %v1188 = vadd.f32 %v1149, %v1168
      %v1189 = vadd.f32 %v1150, %v1168
      %v1190 = vadd.f32 %v1151, %v1168
      %v1191 = vadd.f32 %v1152, %v1168
      %v1192 = vadd.f32 %v1153, %v1168
      %v1193 = vadd.f32 %v1154, %v1168
      %v1194 = vadd.f32 %v1155, %v1168
      %v1195 = vadd.f32 %v1156, %v1168
      %v1196 = vadd.f32 %v1157, %v1168
      %v1197 = vadd.f32 %v1158, %v1168
      %v1198 = vadd.f32 %v1159, %v1168
      %v1199 = vadd.f32 %v1160, %v1168
      %v1200 = vadd.f32 %v1161, %v1168
      %v1201 = vadd.f32 %v1162, %v1168
      %v1202 = vmax.f32 %v1170, 0.0
      %v1203 = vmax.f32 %v1171, 0.0
      %v1204 = vmax.f32 %v1172, 0.0
      %v1205 = vmax.f32 %v1173, 0.0
      %v1206 = vmax.f32 %v1174, 0.0
      %v1207 = vmax.f32 %v1175, 0.0
      %v1208 = vmax.f32 %v1176, 0.0
      %v1209 = vmax.f32 %v1177, 0.0
      %v1210 = vmax.f32 %v1178, 0.0
      %v1211 = vmax.f32 %v1179, 0.0
      %v1212 = vmax.f32 %v1180, 0.0
      %v1213 = vmax.f32 %v1181, 0.0
      %v1214 = vmax.f32 %v1182, 0.0
      %v1215 = vmax.f32 %v1183, 0.0
      %v1216 = vmax.f32 %v1184, 0.0
      %v1217 = vmax.f32 %v1185, 0.0
      %v1218 = vmax.f32 %v1186, 0.0
      %v1219 = vmax.f32 %v1187, 0.0
      %v1220 = vmax.f32 %v1188, 0.0
      %v1221 = vmax.f32 %v1189, 0.0
      %v1222 = vmax.f32 %v1190, 0.0
      %v1223 = vmax.f32 %v1191, 0.0
      %v1224 = vmax.f32 %v1192, 0.0
      %v1225 = vmax.f32 %v1193, 0.0
      %v1226 = vmax.f32 %v1194, 0.0
      %v1227 = vmax.f32 %v1195, 0.0
      %v1228 = vmax.f32 %v1196, 0.0
      %v1229 = vmax.f32 %v1197, 0.0
      %v1230 = vmax.f32 %v1198, 0.0
      %v1231 = vmax.f32 %v1199, 0.0
      %v1232 = vmax.f32 %v1200, 0.0
      %v1233 = vmax.f32 %v1201, 0.0
      %v1234 = vpack.c.bf16 %v1203, %v1202
      %v1235 = vpack.c.bf16 %v1205, %v1204
      %v1236 = vpack.c.bf16 %v1207, %v1206
      %v1237 = vpack.c.bf16 %v1209, %v1208
      %v1238 = vpack.c.bf16 %v1211, %v1210
      %v1239 = vpack.c.bf16 %v1213, %v1212
      %v1240 = vpack.c.bf16 %v1215, %v1214
      %v1241 = vpack.c.bf16 %v1217, %v1216
      %v1242 = vpack.c.bf16 %v1219, %v1218
      %v1243 = vpack.c.bf16 %v1221, %v1220
      %v1244 = vpack.c.bf16 %v1223, %v1222
      %v1245 = vpack.c.bf16 %v1225, %v1224
      %v1246 = vpack.c.bf16 %v1227, %v1226
      %v1247 = vpack.c.bf16 %v1229, %v1228
      %v1248 = vpack.c.bf16 %v1231, %v1230
      %v1249 = vpack.c.bf16 %v1233, %v1232
      %v1250 = vld [vmem:[%s3] sm:$0xf]
      %v1251 = vld [vmem:[%s3 + $0x4] sm:$0xf]
      %v1252 = vld [vmem:[%s4] sm:$0x1]
      %v1254 = vlaneseq
      %v1255 = vshrl.u32 %v1254, 7
      %v1256 = vsub.s32 0, %v1255
      %v1257 = vrot.slane %v1252, %v1256
      %v1261 = vunpack.c.l.b16 %v1250
      %v1262 = vunpack.c.l.b16 %v1251
      %v1263 = vpack.c.b16 %v1262, %v1261
      %vm1265 = vcmask 130048
      %v1267 = vsel %vm1265, %v1234, 0
      %v1270 = vsel %vm1265, %v1235, 0
      %v1273 = vsel %vm1265, %v1236, 0
      %v1276 = vsel %vm1265, %v1237, 0
      %v1279 = vsel %vm1265, %v1238, 0
      %v1282 = vsel %vm1265, %v1239, 0
      %v1285 = vsel %vm1265, %v1240, 0
      %v1288 = vsel %vm1265, %v1241, 0
      %v1291 = vsel %vm1265, %v1242, 0
      %v1294 = vsel %vm1265, %v1243, 0
      %v1297 = vsel %vm1265, %v1244, 0
      %v1300 = vsel %vm1265, %v1245, 0
      %v1303 = vsel %vm1265, %v1246, 0
      %v1306 = vsel %vm1265, %v1247, 0
      %v1309 = vsel %vm1265, %v1248, 0
      %v1312 = vsel %vm1265, %v1249, 0
      %1314 = vmatprep.subr.bf16.mxu0 0
      %1315 = vmatpush1.bf16.msra.mxu0 0
      %1316 = vmatprep.subr.bf16.mxu0 0
      %1317 = vmatpush1.bf16.msra.mxu0 0
      %1318 = vmatprep.subr.bf16.mxu0 0
      %1319 = vmatpush1.bf16.msra.mxu0 0
      %1320 = vmatprep.subr.bf16.mxu0 0
      %1321 = vmatpush1.bf16.msra.mxu0 0
      %1322 = vmatprep.subr.bf16.mxu0 0
      %1323 = vmatpush1.bf16.msra.mxu0 0
      %1324 = vmatprep.subr.bf16.mxu0 0
      %1325 = vmatpush1.bf16.msra.mxu0 0
      %1326 = vmatprep.subr.bf16.mxu0 0
      %1327 = vmatpush1.bf16.msra.mxu0 0
      %1328 = vmatprep.subr.bf16.mxu0 0
      %1329 = vmatpush1.bf16.msra.mxu0 %v1263
      %1330 = vmatprep.subr.bf16.mxu0 0
      %1331 = vmatpush2.bf16.msra.mxu0 0
      %1332 = vmatprep.subr.bf16.mxu0 0
      %1333 = vmatpush2.bf16.msra.mxu0 0
      %1334 = vmatprep.subr.bf16.mxu0 0
      %1335 = vmatpush2.bf16.msra.mxu0 0
      %1336 = vmatprep.subr.bf16.mxu0 0
      %1337 = vmatpush2.bf16.msra.mxu0 0
      %1338 = vmatprep.subr.bf16.mxu0 0
      %1339 = vmatpush2.bf16.msra.mxu0 0
      %1340 = vmatprep.subr.bf16.mxu0 0
      %1341 = vmatpush2.bf16.msra.mxu0 0
      %1342 = vmatprep.subr.bf16.mxu0 0
      %1343 = vmatpush2.bf16.msra.mxu0 0
      %1344 = vmatprep.subr.bf16.mxu0 0
      %1345 = vmatpush2.bf16.msra.mxu0 0
      %1346 = vmatprep.mubr.bf16.mxu0 0
      %1347 = vmatmul.mubr.bf16.gmra.mxu0 %v1267
      %v1348 = vpop.f32.mrf.mxu0
      %v1349 = vadd.f32 %v1257, %v1348
      %v1350 = vpop.f32.mrf.mxu0
      %v1351 = vpop.f32.mrf.mxu0
      %v1352 = vadd.f32 %v1257, %v1351
      %v1353 = vpop.f32.mrf.mxu0
      %1354 = vmatprep.mubr.bf16.mxu0 0
      %1355 = vmatmul.mubr.bf16.gmra.mxu0 %v1270
      %v1356 = vpop.f32.mrf.mxu0
      %v1357 = vadd.f32 %v1257, %v1356
      %v1358 = vpop.f32.mrf.mxu0
      %v1359 = vpop.f32.mrf.mxu0
      %v1360 = vadd.f32 %v1257, %v1359
      %v1361 = vpop.f32.mrf.mxu0
      %1362 = vmatprep.mubr.bf16.mxu0 0
      %1363 = vmatmul.mubr.bf16.gmra.mxu0 %v1273
      %v1364 = vpop.f32.mrf.mxu0
      %v1365 = vadd.f32 %v1257, %v1364
      %v1366 = vpop.f32.mrf.mxu0
      %v1367 = vpop.f32.mrf.mxu0
      %v1368 = vadd.f32 %v1257, %v1367
      %v1369 = vpop.f32.mrf.mxu0
      %1370 = vmatprep.mubr.bf16.mxu0 0
      %1371 = vmatmul.mubr.bf16.gmra.mxu0 %v1276
      %v1372 = vpop.f32.mrf.mxu0
      %v1373 = vadd.f32 %v1257, %v1372
      %v1374 = vpop.f32.mrf.mxu0
      %v1375 = vpop.f32.mrf.mxu0
      %v1376 = vadd.f32 %v1257, %v1375
      %v1377 = vpop.f32.mrf.mxu0
      %1378 = vmatprep.mubr.bf16.mxu0 0
      %1379 = vmatmul.mubr.bf16.gmra.mxu0 %v1279
      %v1380 = vpop.f32.mrf.mxu0
      %v1381 = vadd.f32 %v1257, %v1380
      %v1382 = vpop.f32.mrf.mxu0
      %v1383 = vpop.f32.mrf.mxu0
      %v1384 = vadd.f32 %v1257, %v1383
      %v1385 = vpop.f32.mrf.mxu0
      %1386 = vmatprep.mubr.bf16.mxu0 0
      %1387 = vmatmul.mubr.bf16.gmra.mxu0 %v1282
      %v1388 = vpop.f32.mrf.mxu0
      %v1389 = vadd.f32 %v1257, %v1388
      %v1390 = vpop.f32.mrf.mxu0
      %v1391 = vpop.f32.mrf.mxu0
      %v1392 = vadd.f32 %v1257, %v1391
      %v1393 = vpop.f32.mrf.mxu0
      %1394 = vmatprep.mubr.bf16.mxu0 0
      %1395 = vmatmul.mubr.bf16.gmra.mxu0 %v1285
      %v1396 = vpop.f32.mrf.mxu0
      %v1397 = vadd.f32 %v1257, %v1396
      %v1398 = vpop.f32.mrf.mxu0
      %v1399 = vpop.f32.mrf.mxu0
      %v1400 = vadd.f32 %v1257, %v1399
      %v1401 = vpop.f32.mrf.mxu0
      %1402 = vmatprep.mubr.bf16.mxu0 0
      %1403 = vmatmul.mubr.bf16.gmra.mxu0 %v1288
      %v1404 = vpop.f32.mrf.mxu0
      %v1405 = vadd.f32 %v1257, %v1404
      %v1406 = vpop.f32.mrf.mxu0
      %v1407 = vpop.f32.mrf.mxu0
      %v1408 = vadd.f32 %v1257, %v1407
      %v1409 = vpop.f32.mrf.mxu0
      %1410 = vmatprep.mubr.bf16.mxu0 0
      %1411 = vmatmul.mubr.bf16.gmra.mxu0 %v1291
      %v1412 = vpop.f32.mrf.mxu0
      %v1413 = vadd.f32 %v1257, %v1412
      %v1414 = vpop.f32.mrf.mxu0
      %v1415 = vpop.f32.mrf.mxu0
      %v1416 = vadd.f32 %v1257, %v1415
      %v1417 = vpop.f32.mrf.mxu0
      %1418 = vmatprep.mubr.bf16.mxu0 0
      %1419 = vmatmul.mubr.bf16.gmra.mxu0 %v1294
      %v1420 = vpop.f32.mrf.mxu0
      %v1421 = vadd.f32 %v1257, %v1420
      %v1422 = vpop.f32.mrf.mxu0
      %v1423 = vpop.f32.mrf.mxu0
      %v1424 = vadd.f32 %v1257, %v1423
      %v1425 = vpop.f32.mrf.mxu0
      %1426 = vmatprep.mubr.bf16.mxu0 0
      %1427 = vmatmul.mubr.bf16.gmra.mxu0 %v1297
      %v1428 = vpop.f32.mrf.mxu0
      %v1429 = vadd.f32 %v1257, %v1428
      %v1430 = vpop.f32.mrf.mxu0
      %v1431 = vpop.f32.mrf.mxu0
      %v1432 = vadd.f32 %v1257, %v1431
      %v1433 = vpop.f32.mrf.mxu0
      %1434 = vmatprep.mubr.bf16.mxu0 0
      %1435 = vmatmul.mubr.bf16.gmra.mxu0 %v1300
      %v1436 = vpop.f32.mrf.mxu0
      %v1437 = vadd.f32 %v1257, %v1436
      %v1438 = vpop.f32.mrf.mxu0
      %v1439 = vpop.f32.mrf.mxu0
      %v1440 = vadd.f32 %v1257, %v1439
      %v1441 = vpop.f32.mrf.mxu0
      %1442 = vmatprep.mubr.bf16.mxu0 0
      %1443 = vmatmul.mubr.bf16.gmra.mxu0 %v1303
      %v1444 = vpop.f32.mrf.mxu0
      %v1445 = vadd.f32 %v1257, %v1444
      %v1446 = vpop.f32.mrf.mxu0
      %v1447 = vpop.f32.mrf.mxu0
      %v1448 = vadd.f32 %v1257, %v1447
      %v1449 = vpop.f32.mrf.mxu0
      %1450 = vmatprep.mubr.bf16.mxu0 0
      %1451 = vmatmul.mubr.bf16.gmra.mxu0 %v1306
      %v1452 = vpop.f32.mrf.mxu0
      %v1453 = vadd.f32 %v1257, %v1452
      %v1454 = vpop.f32.mrf.mxu0
      %v1455 = vpop.f32.mrf.mxu0
      %v1456 = vadd.f32 %v1257, %v1455
      %v1457 = vpop.f32.mrf.mxu0
      %1458 = vmatprep.mubr.bf16.mxu0 0
      %1459 = vmatmul.mubr.bf16.gmra.mxu0 %v1309
      %v1460 = vpop.f32.mrf.mxu0
      %v1461 = vadd.f32 %v1257, %v1460
      %v1462 = vpop.f32.mrf.mxu0
      %v1463 = vpop.f32.mrf.mxu0
      %v1464 = vadd.f32 %v1257, %v1463
      %v1465 = vpop.f32.mrf.mxu0
      %1466 = vmatprep.mubr.bf16.mxu0 0
      %1467 = vmatmul.mubr.bf16.gmra.mxu0 %v1312
      %v1468 = vpop.f32.mrf.mxu0
      %v1469 = vadd.f32 %v1257, %v1468
      %v1470 = vpop.f32.mrf.mxu0
      %v1471 = vpop.f32.mrf.mxu0
      %v1472 = vadd.f32 %v1257, %v1471
      %v1473 = vpop.f32.mrf.mxu0
      %1474 = vdwg.mxu0
      %v1475 = vmax.f32 %v1349, 0.0
      %v1476 = vmax.f32 %v1352, 0.0
      %v1477 = vmax.f32 %v1357, 0.0
      %v1478 = vmax.f32 %v1360, 0.0
      %v1479 = vmax.f32 %v1365, 0.0
      %v1480 = vmax.f32 %v1368, 0.0
      %v1481 = vmax.f32 %v1373, 0.0
      %v1482 = vmax.f32 %v1376, 0.0
      %v1483 = vmax.f32 %v1381, 0.0
      %v1484 = vmax.f32 %v1384, 0.0
      %v1485 = vmax.f32 %v1389, 0.0
      %v1486 = vmax.f32 %v1392, 0.0
      %v1487 = vmax.f32 %v1397, 0.0
      %v1488 = vmax.f32 %v1400, 0.0
      %v1489 = vmax.f32 %v1405, 0.0
      %v1490 = vmax.f32 %v1408, 0.0
      %v1491 = vmax.f32 %v1413, 0.0
      %v1492 = vmax.f32 %v1416, 0.0
      %v1493 = vmax.f32 %v1421, 0.0
      %v1494 = vmax.f32 %v1424, 0.0
      %v1495 = vmax.f32 %v1429, 0.0
      %v1496 = vmax.f32 %v1432, 0.0
      %v1497 = vmax.f32 %v1437, 0.0
      %v1498 = vmax.f32 %v1440, 0.0
      %v1499 = vmax.f32 %v1445, 0.0
      %v1500 = vmax.f32 %v1448, 0.0
      %v1501 = vmax.f32 %v1453, 0.0
      %v1502 = vmax.f32 %v1456, 0.0
      %v1503 = vmax.f32 %v1461, 0.0
      %v1504 = vmax.f32 %v1464, 0.0
      %v1505 = vmax.f32 %v1469, 0.0
      %v1506 = vmax.f32 %v1472, 0.0
      %1507 = vst [vmem:[%s248] sm:$0xff] %v1475
      %1508 = vst [vmem:[%s248 + $0x8] sm:$0xff] %v1476
      %1509 = vst [vmem:[%s248 + $0x10] sm:$0xff] %v1477
      %1510 = vst [vmem:[%s248 + $0x18] sm:$0xff] %v1478
      %1511 = vst [vmem:[%s248 + $0x20] sm:$0xff] %v1479
      %1512 = vst [vmem:[%s248 + $0x28] sm:$0xff] %v1480
      %1513 = vst [vmem:[%s248 + $0x30] sm:$0xff] %v1481
      %1514 = vst [vmem:[%s248 + $0x38] sm:$0xff] %v1482
      %1515 = vst [vmem:[%s248 + $0x40] sm:$0xff] %v1483
      %1516 = vst [vmem:[%s248 + $0x48] sm:$0xff] %v1484
      %1517 = vst [vmem:[%s248 + $0x50] sm:$0xff] %v1485
      %1518 = vst [vmem:[%s248 + $0x58] sm:$0xff] %v1486
      %1519 = vst [vmem:[%s248 + $0x60] sm:$0xff] %v1487
      %1520 = vst [vmem:[%s248 + $0x68] sm:$0xff] %v1488
      %1521 = vst [vmem:[%s248 + $0x70] sm:$0xff] %v1489
      %1522 = vst [vmem:[%s248 + $0x78] sm:$0xff] %v1490
      %1523 = vst [vmem:[%s248 + $0x80] sm:$0xff] %v1491
      %1524 = vst [vmem:[%s248 + $0x88] sm:$0xff] %v1492
      %1525 = vst [vmem:[%s248 + $0x90] sm:$0xff] %v1493
      %1526 = vst [vmem:[%s248 + $0x98] sm:$0xff] %v1494
      %1527 = vst [vmem:[%s248 + $0xa0] sm:$0xff] %v1495
      %1528 = vst [vmem:[%s248 + $0xa8] sm:$0xff] %v1496
      %1529 = vst [vmem:[%s248 + $0xb0] sm:$0xff] %v1497
      %1530 = vst [vmem:[%s248 + $0xb8] sm:$0xff] %v1498
      %1531 = vst [vmem:[%s248 + $0xc0] sm:$0xff] %v1499
      %1532 = vst [vmem:[%s248 + $0xc8] sm:$0xff] %v1500
      %1533 = vst [vmem:[%s248 + $0xd0] sm:$0xff] %v1501
      %1534 = vst [vmem:[%s248 + $0xd8] sm:$0xff] %v1502
      %1535 = vst [vmem:[%s248 + $0xe0] sm:$0xff] %v1503
      %1536 = vst [vmem:[%s248 + $0xe8] sm:$0xff] %v1504
      %1537 = vst [vmem:[%s248 + $0xf0] sm:$0xff] %v1505
      %1538 = vst [vmem:[%s248 + $0xf8] sm:$0xff] %v1506
      %s1539 = smul.u32 16, %s21
      %p1540 = scmp.lt.s32.totalorder %s20, 1
      %s1541 = scalar_select %p1540, %s20, 1
      %p1542 = scmp.lt.s32.totalorder %s1539, 15
      %s1543 = scalar_select %p1542, %s1539, 15
      %s1544 = smul.addr %s1543, 2
      %s1545 = smul.addr %s1541, 32
      %s1546 = sadd.s32 %s1544, %s1545
      %s1547 = smul.addr %s1546, 8
      %s1548 = scalar_lea.vmem %s5, %s1547
      // Predicated region
      $region41: #{forward.2} parent=39 // pred_check
        %p1549 = pneg %p158
      $region42: #{forward.2} parent=39 // pred_check_branch
        %1551 = sbr.rel (%p1549) target = $region44
      $region43: #{forward.2} parent=39 // pred_region
        %s1552 = smul.u32 16, %s21
      $region44: #{forward.2} parent=39 // pred_fallthru
        _
    $region40: #{forward.2} parent=5 // pred_fallthru
      _
    %p1553 = scmp.le.s32.totalorder 2, %s11
    // Predicated region
    $region45: #{forward.2} parent=5 // pred_check
      %p1554 = pneg %p1553
    $region46: #{forward.2} parent=5 // pred_check_branch
      %1556 = sbr.rel (%p1554) target = $region48
    $region47: #{forward.2} parent=5 // pred_region
      %s1557 = ssub.s32 %s11, 2
      // Predicated region
      $region49: #{forward.2} parent=47 // pred_check
        %p1558 = pneg %p164
      $region50: #{forward.2} parent=47 // pred_check_branch
        %1560 = sbr.rel (%p1558) target = $region52
      $region51: #{forward.2} parent=47 // pred_region
        %s1561 = smul.u32 16, %s23
        %p1562 = scmp.lt.s32.totalorder %s22, 1
        %s1563 = scalar_select %p1562, %s22, 1
        %p1564 = scmp.lt.s32.totalorder %s1561, 15
        %s1565 = scalar_select %p1564, %s1561, 15
        %s1566 = smul.addr %s1565, 2
        %s1567 = smul.addr %s1563, 32
        %s1568 = sadd.s32 %s1566, %s1567
        %s1569 = smul.addr %s1568, 8
        %s1570 = scalar_lea.vmem %s5, %s1569
      $region52: #{forward.2} parent=47 // pred_fallthru
        _
    $region48: #{forward.2} parent=5 // pred_fallthru
      _
  $region6: #{forward.2} parent=0 // loop_footer
    %s15 = sadd.s32 1, %s11
  $region7: #{forward.2} parent=0 // loop_footer_branch
    %10 = sbr.rel target = $region3
  $region8: #{forward.2} parent=0 // loop_exit
    _

</llo_original>
